<compile_context>
chip_gen: v6e
topology: v6e:2x2x1
jax: 0.10.0
libtpu: 0.0.40
codegen_flags: <defaults>
</compile_context>

<pallas_src>
import jax
import jax.numpy as jnp
from jax.experimental import pallas as pl
from jax.experimental.pallas import tpu as pltpu


_TILE_N = 1024   # rows (spatial cells) per grid step


def _cdiv(a, b):
    return -(-a // b)


def _f_kernel(t_ref, u_ref, w1_ref, b1_ref, w1sum_ref, w2_ref, b2_ref, o_ref):
    """One (time-step s, row-tile i) evaluation of f(t, u).

    t_ref:     [S]        f32 in SMEM (whole time vector, indexed by program_id(0))
    u_ref:     [tile_n,D] bf16 VMEM tile of the state
    w1_ref:    [D, H]     bf16 (VMEM-resident across the whole grid)
    b1_ref:    [1, H]     f32
    w1sum_ref: [1, H]     f32  (column sums of W1, f32-exact t-fold)
    w2_ref:    [H, D]     bf16
    b2_ref:    [1, D]     f32
    o_ref:     [tile_n,D] bf16 output tile
    """
    s = pl.program_id(0)
    t = t_ref[s]                                   # scalar time for this stage

    # (u + t) @ W1  ==  u @ W1 + t * colsum(W1)   (fold done in f32, exact)
    bias = b1_ref[...] + t * w1sum_ref[...]        # [1, H] f32, negligible VPU work

    h = jnp.tanh(
        jnp.dot(u_ref[...], w1_ref[...], preferred_element_type=jnp.float32)
        + bias
    )
    out = (
        jnp.dot(h.astype(jnp.bfloat16), w2_ref[...],
                preferred_element_type=jnp.float32)
        + b2_ref[...]
    )
    o_ref[...] = out.astype(o_ref.dtype)


def prepare_params(w1, b1, w2, b2):
    """One-time parameter prep (outside the hot ODE loop)."""
    w1 = jnp.asarray(w1, jnp.float32)
    b1 = jnp.asarray(b1, jnp.float32).reshape(1, -1)
    w2 = jnp.asarray(w2, jnp.float32)
    b2 = jnp.asarray(b2, jnp.float32).reshape(1, -1)
    w1sum = jnp.sum(w1, axis=0, keepdims=True)     # [1, H] f32, computed pre-cast
    return (
        w1.astype(jnp.bfloat16),
        b1,
        w1sum,
        w2.astype(jnp.bfloat16),
        b2,
    )


def _choose_tile(S, N):
    """Pick a row tile: as big as possible, but keep >= 2 grid blocks for v7x."""
    n8 = _cdiv(N, 8) * 8
    tile_n = min(_TILE_N, n8)
    if S * _cdiv(n8, tile_n) < 2 and n8 >= 16:
        tile_n = _cdiv(n8 // 2, 8) * 8             # split rows so both TCs get work
    return tile_n


def wrapper_forward_batched(ts, us, params):
    """Fused evaluation out[s] = f(ts[s], us[s]) for all s in ONE pallas_call.

    ts: [S] times, us: [S, N, D] states.  Returns [S, N, D] bf16.
    """
    w1b, b1f, w1sum, w2b, b2f = params
    S, N, D = us.shape
    H = w1b.shape[1]
    assert w1b.shape[0] == D and w2b.shape == (H, D)

    ts = jnp.asarray(ts, jnp.float32).reshape(S)
    # Stream the state into the kernel as bf16 (MXU-native, half the DMA bytes).
    # Ideally the integrator keeps its state in bf16 so this cast is a no-op.
    us = us.astype(jnp.bfloat16)

    tile_n = _choose_tile(S, N)
    n_pad = _cdiv(N, tile_n) * tile_n
    if n_pad != N:
        us = jnp.pad(us, ((0, 0), (0, n_pad - N), (0, 0)))

    grid = (S, n_pad // tile_n)

    out = pl.pallas_call(
        _f_kernel,
        out_shape=jax.ShapeDtypeStruct((S, n_pad, D), jnp.bfloat16),
        grid_spec=pltpu.PrefetchScalarGridSpec(
            num_scalar_prefetch=0,
            grid=grid,
            in_specs=[
                # time vector -> SMEM (untiled), indexed with program_id(0)
                pl.BlockSpec(memory_space=pltpu.MemorySpace.SMEM),
                # state: tiled over (stage, row-tile); last dim = full D
                pl.BlockSpec((None, tile_n, D), lambda s, i: (s, i, 0)),
                # weights/biases: constant index_map -> DMA'd once, VMEM-resident
                pl.BlockSpec((D, H), lambda s, i: (0, 0)),
                pl.BlockSpec((1, H), lambda s, i: (0, 0)),
                pl.BlockSpec((1, H), lambda s, i: (0, 0)),
                pl.BlockSpec((H, D), lambda s, i: (0, 0)),
                pl.BlockSpec((1, D), lambda s, i: (0, 0)),
            ],
            # native D=32 output (block last dim == full array dim), bf16 writeback
            out_specs=pl.BlockSpec((None, tile_n, D), lambda s, i: (s, i, 0)),
        ),
        compiler_params=pltpu.CompilerParams(
            dimension_semantics=("parallel", "parallel"),
        ),
    )(ts, us, w1b, b1f, w1sum, w2b, b2f)

    if n_pad != N:
        out = out[:, :N, :]
    return out


def wrapper_forward(t, u, params):
    """Pallas equivalent of Wrapper(f).forward(t, u) -> f(t, u) (single eval)."""
    ts = jnp.reshape(jnp.asarray(t, jnp.float32), (1,))
    return wrapper_forward_batched(ts, u[None], params)[0]


def _reference_forward(ts, us, w1, b1, w2, b2):
    z = us + ts[:, None, None]
    h = jnp.tanh(jnp.einsum("snd,dh->snh", z, w1) + b1)
    return jnp.einsum("snh,hd->snd", h, w2) + b2


if __name__ == "__main__":
    key = jax.random.PRNGKey(0)
    k_u, k_w1, k_b1, k_w2, k_b2 = jax.random.split(key, 5)

    # S ODE-RHS evaluations (integrator stages) fused into one kernel launch.
    S, N, D, H = 4, 512, 32, 128

    ts = jnp.linspace(0.0, 1.0, S, dtype=jnp.float32)
    us = jax.random.normal(k_u, (S, N, D), dtype=jnp.float32)

    # Deterministic synthetic parameters (no checkpoint load).
    w1 = jax.random.normal(k_w1, (D, H), dtype=jnp.float32) * 0.1
    b1 = jax.random.normal(k_b1, (1, H), dtype=jnp.float32) * 0.01
    w2 = jax.random.normal(k_w2, (H, D), dtype=jnp.float32) * 0.1
    b2 = jax.random.normal(k_b2, (1, D), dtype=jnp.float32) * 0.01

    params = prepare_params(w1, b1, w2, b2)

    # Fused batch of S evaluations.
    out = jax.block_until_ready(wrapper_forward_batched(ts, us, params))
    ref = _reference_forward(ts, us, w1, b1, w2, b2)
    assert out.shape == (S, N, D)
    out_f32 = out.astype(jnp.float32)
    max_diff = jnp.max(jnp.abs(out_f32 - ref))
    # bf16 state/weights/output (f32 accumulation) vs pure-f32 reference.
    assert jnp.allclose(out_f32, ref, atol=3e-2, rtol=3e-2), f"mismatch: {max_diff}"

    # Single Wrapper.forward(t, u) call (S = 1): exercises the >=2-block path.
    out1 = jax.block_until_ready(wrapper_forward(ts[0], us[0], params))
    ref1 = _reference_forward(ts[:1], us[:1], w1, b1, w2, b2)[0]
    assert out1.shape == (N, D)
    assert jnp.allclose(out1.astype(jnp.float32), ref1, atol=3e-2, rtol=3e-2), \
        "single-eval mismatch"

    print("KERNEL_OK")
</pallas_src>

<mosaic_0001>
module attributes {stable_mosaic.version = 11 : i64} {
  func.func @_f_kernel(%arg0: i32, %arg1: i32, %arg2: memref<4xf32, #tpu.memory_space<smem>>, %arg3: memref<1x512x32xbf16, #tpu.memory_space<vmem>>, %arg4: memref<32x128xbf16, #tpu.memory_space<vmem>>, %arg5: memref<1x128xf32, #tpu.memory_space<vmem>>, %arg6: memref<1x128xf32, #tpu.memory_space<vmem>>, %arg7: memref<128x32xbf16, #tpu.memory_space<vmem>>, %arg8: memref<1x32xf32, #tpu.memory_space<vmem>>, %arg9: memref<1x512x32xbf16, #tpu.memory_space<vmem>>) attributes {dimension_semantics = [#tpu.dimension_semantics<parallel>, #tpu.dimension_semantics<parallel>], iteration_bounds = array<i64: 4, 1>, scalar_prefetch = 0 : i64, scratch_operands = 0 : i64, tpu.core_type = #tpu.core_type<tc>, window_params = [{transform_indices = @transform_0, window_bounds = array<i64: 4>}, {transform_indices = @transform_1, window_bounds = array<i64: 1, 512, 32>}, {pipeline_mode = #tpu.pipeline_mode<synchronous>, transform_indices = @transform_2, window_bounds = array<i64: 32, 128>}, {pipeline_mode = #tpu.pipeline_mode<synchronous>, transform_indices = @transform_3, window_bounds = array<i64: 1, 128>}, {pipeline_mode = #tpu.pipeline_mode<synchronous>, transform_indices = @transform_4, window_bounds = array<i64: 1, 128>}, {pipeline_mode = #tpu.pipeline_mode<synchronous>, transform_indices = @transform_5, window_bounds = array<i64: 128, 32>}, {pipeline_mode = #tpu.pipeline_mode<synchronous>, transform_indices = @transform_6, window_bounds = array<i64: 1, 32>}, {transform_indices = @transform_7, window_bounds = array<i64: 1, 512, 32>}]} {
    %0 = arith.index_cast %arg0 : i32 to index
    %1 = memref.load %arg2[%0] : memref<4xf32, #tpu.memory_space<smem>>
    %c0 = arith.constant 0 : index
    %c0_0 = arith.constant 0 : index
    %2 = vector.load %arg5[%c0, %c0_0] : memref<1x128xf32, #tpu.memory_space<vmem>>, vector<1x128xf32>
    %c0_1 = arith.constant 0 : index
    %c0_2 = arith.constant 0 : index
    %3 = vector.load %arg6[%c0_1, %c0_2] : memref<1x128xf32, #tpu.memory_space<vmem>>, vector<1x128xf32>
    %4 = vector.broadcast %1 : f32 to vector<1x128xf32>
    %5 = arith.mulf %4, %3 : vector<1x128xf32>
    %6 = arith.addf %2, %5 : vector<1x128xf32>
    %c0_3 = arith.constant 0 : index
    %c0_4 = arith.constant 0 : index
    %c0_5 = arith.constant 0 : index
    %7 = vector.load %arg3[%c0_3, %c0_4, %c0_5] : memref<1x512x32xbf16, #tpu.memory_space<vmem>>, vector<1x512x32xbf16>
    %8 = vector.shape_cast %7 : vector<1x512x32xbf16> to vector<512x32xbf16>
    %c0_6 = arith.constant 0 : index
    %c0_7 = arith.constant 0 : index
    %9 = vector.load %arg4[%c0_6, %c0_7] : memref<32x128xbf16, #tpu.memory_space<vmem>>, vector<32x128xbf16>
    %cst = arith.constant dense<0.000000e+00> : vector<512x128xf32>
    %10 = tpu.matmul %8, %9, %cst {dimension_numbers = #tpu.dot_dimension_numbers<[1], [0], [0], [1], [0, 0, 1, 1], [], []>} : vector<512x32xbf16>, vector<32x128xbf16>, vector<512x128xf32> -> vector<512x128xf32>
    %11 = vector.broadcast %6 : vector<1x128xf32> to vector<512x128xf32>
    %12 = arith.addf %10, %11 : vector<512x128xf32>
    %13 = math.tanh %12 : vector<512x128xf32>
    %14 = arith.truncf %13 : vector<512x128xf32> to vector<512x128xbf16>
    %c0_8 = arith.constant 0 : index
    %c0_9 = arith.constant 0 : index
    %15 = vector.load %arg7[%c0_8, %c0_9] : memref<128x32xbf16, #tpu.memory_space<vmem>>, vector<128x32xbf16>
    %cst_10 = arith.constant dense<0.000000e+00> : vector<512x32xf32>
    %16 = tpu.matmul %14, %15, %cst_10 {dimension_numbers = #tpu.dot_dimension_numbers<[1], [0], [0], [1], [0, 0, 1, 1], [], []>} : vector<512x128xbf16>, vector<128x32xbf16>, vector<512x32xf32> -> vector<512x32xf32>
    %c0_11 = arith.constant 0 : index
    %c0_12 = arith.constant 0 : index
    %17 = vector.load %arg8[%c0_11, %c0_12] : memref<1x32xf32, #tpu.memory_space<vmem>>, vector<1x32xf32>
    %18 = vector.broadcast %17 : vector<1x32xf32> to vector<512x32xf32>
    %19 = arith.addf %16, %18 : vector<512x32xf32>
    %20 = arith.truncf %19 : vector<512x32xf32> to vector<512x32xbf16>
    %c0_13 = arith.constant 0 : index
    %c0_14 = arith.constant 0 : index
    %c0_15 = arith.constant 0 : index
    %21 = vector.load %arg9[%c0_13, %c0_14, %c0_15] : memref<1x512x32xbf16, #tpu.memory_space<vmem>>, vector<1x512x32xbf16>
    %22 = vector.shape_cast %21 : vector<1x512x32xbf16> to vector<512x32xbf16>
    %23 = vector.shape_cast %20 : vector<512x32xbf16> to vector<1x512x32xbf16>
    tpu.vector_store %arg9[%c0_13, %c0_14, %c0_15], %23 {strides = array<i32>} : memref<1x512x32xbf16, #tpu.memory_space<vmem>>, vector<1x512x32xbf16>,
    return
  }
  func.func @transform_0(%arg0: i32, %arg1: i32) -> i32 {
    %c0_i32 = arith.constant 0 : i32
    %c0_i32_0 = arith.constant 0 : i32
    return %c0_i32 : i32
  }
  func.func @transform_1(%arg0: i32, %arg1: i32) -> (i32, i32, i32) {
    %c0_i32 = arith.constant 0 : i32
    %c0_i32_0 = arith.constant 0 : i32
    return %arg0, %arg1, %c0_i32 : i32, i32, i32
  }
  func.func @transform_2(%arg0: i32, %arg1: i32) -> (i32, i32) {
    %c0_i32 = arith.constant 0 : i32
    %c0_i32_0 = arith.constant 0 : i32
    %c0_i32_1 = arith.constant 0 : i32
    return %c0_i32, %c0_i32_0 : i32, i32
  }
  func.func @transform_3(%arg0: i32, %arg1: i32) -> (i32, i32) {
    %c0_i32 = arith.constant 0 : i32
    %c0_i32_0 = arith.constant 0 : i32
    %c0_i32_1 = arith.constant 0 : i32
    return %c0_i32, %c0_i32_0 : i32, i32
  }
  func.func @transform_4(%arg0: i32, %arg1: i32) -> (i32, i32) {
    %c0_i32 = arith.constant 0 : i32
    %c0_i32_0 = arith.constant 0 : i32
    %c0_i32_1 = arith.constant 0 : i32
    return %c0_i32, %c0_i32_0 : i32, i32
  }
  func.func @transform_5(%arg0: i32, %arg1: i32) -> (i32, i32) {
    %c0_i32 = arith.constant 0 : i32
    %c0_i32_0 = arith.constant 0 : i32
    %c0_i32_1 = arith.constant 0 : i32
    return %c0_i32, %c0_i32_0 : i32, i32
  }
  func.func @transform_6(%arg0: i32, %arg1: i32) -> (i32, i32) {
    %c0_i32 = arith.constant 0 : i32
    %c0_i32_0 = arith.constant 0 : i32
    %c0_i32_1 = arith.constant 0 : i32
    return %c0_i32, %c0_i32_0 : i32, i32
  }
  func.func @transform_7(%arg0: i32, %arg1: i32) -> (i32, i32, i32) {
    %c0_i32 = arith.constant 0 : i32
    %c0_i32_0 = arith.constant 0 : i32
    return %arg0, %arg1, %c0_i32 : i32, i32, i32
  }
}

</mosaic_0001>

<llo_original>
// kernel: tpu_custom_call.1
$region0: #{tpu_custom_call.1}
  #allocation0 [shape = 'u32[]', space=smem, size = 0x4, offset = 0x4, fixed_abs, tag = 'smem constant byte address 0x4 - core index']
  #allocation1 [shape = 'u32[144,128]{1,0:T(1,128)}', space=vmem, size = 0x12000, scoped, tag = 'internal scratch']
  %s0 = inlined_call_operand.vmem [shape: f32[4], index: 0, kind: input, shape index: {}]
  %s1 = inlined_call_operand.vmem [shape: bf16[4,512,32], index: 1, kind: input, shape index: {}]
  %s2 = inlined_call_operand.vmem [shape: bf16[32,128], index: 2, kind: input, shape index: {}]
  %s3 = inlined_call_operand.vmem [shape: f32[1,128], index: 3, kind: input, shape index: {}]
  %s4 = inlined_call_operand.vmem [shape: f32[1,128], index: 4, kind: input, shape index: {}]
  %s5 = inlined_call_operand.vmem [shape: bf16[128,32], index: 5, kind: input, shape index: {}]
  %s6 = inlined_call_operand.vmem [shape: f32[1,32], index: 6, kind: input, shape index: {}]
  %s7 = inlined_call_operand.vmem [shape: bf16[4,512,32], index: 7, kind: output, shape index: {}]
  %s8 = sld [smem:[#allocation0]]
  $region65: #{tpu_custom_call.1} parent=0
    _
  %s10 = ssub.s32 1, %s8
  %s11 = scalar_select 0, %s10, %s8
  $region1: #{tpu_custom_call.1} parent=0
    #allocation2 [shape = 'u8[512]{0}', space=smem, size = 0x200, scoped, tag = 'input window, operand 0, single buffered']
    #allocation3 [shape = 's32[2]{0}', space=sflag, size = 0x8, scoped, tag = 'scoped memory for tpu_custom_call.1']
    %12 = vsyncpa [#allocation3], 0
    loop: start=0, step=1, limit=6
    $region2: #{tpu_custom_call.1} parent=1 // loop_pre_header
      _
    $region3: #{tpu_custom_call.1} parent=1 // loop_header
      %s14 = sphi 0, %s18
      %p15 = scmp.ge.s32.totalorder %s14, 6
      %s21 = sphi 0, %s33
      %s22 = sphi 0, %s29
      %s23 = sphi 0, %s21
      %s24 = sphi 0, %s22
      %s25 = sphi 0, %s23
      %s26 = sphi 0, %s24
      %s34 = sphi 0, %s34
      %s36 = sphi 0, %s34
      %s37 = sphi 0, %s36
      %s51 = sphi 0, %s37
      %s59 = sphi 0, %s61
      %s62 = sphi 0, %s59
      %s63 = sphi 0, %s62
      %s79 = sphi 0, %s63
      %s83 = sphi 0, %s83
      %s85 = sphi 0, %s83
      %s86 = sphi 0, %s85
      %s100 = sphi 0, %s86
      %s104 = sphi 0, %s104
      %s106 = sphi 0, %s104
      %s107 = sphi 0, %s106
      %s121 = sphi 0, %s107
      %s125 = sphi 0, %s125
      %s127 = sphi 0, %s125
      %s128 = sphi 0, %s127
      %s142 = sphi 0, %s128
      %s146 = sphi 0, %s146
      %s148 = sphi 0, %s146
      %s149 = sphi 0, %s148
      %s163 = sphi 0, %s149
      %s167 = sphi 0, %s167
      %s169 = sphi 0, %s167
      %s170 = sphi 0, %s169
      %s184 = sphi 0, %s170
      %s192 = sphi 0, %s194
      %s195 = sphi 0, %s192
      %s196 = sphi 0, %s195
      %s212 = sphi 0, %s196
    $region4: #{tpu_custom_call.1} parent=1 // loop_header_branch
      %17 = sbr.rel (%p15) target = $region8
    $region5: #{tpu_custom_call.1} parent=1 // loop_body
      %s19 = ssub.s32 %s14, 1
      %s20 = ssub.s32 %s14, 2
      %s27 = sadd.s32 1, %s22
      %p28 = scmp.ge.s32.totalorder %s27, 1
      %s29 = scalar_select %p28, 0, %s27
      %s30 = sadd.s32 1, %s21
      %s31 = scalar_select %p28, %s30, %s21
      %p32 = scmp.ge.s32.totalorder %s31, 4
      %s33 = scalar_select %p32, 0, %s31
      %s35 = sadd.s32 %s34, 1
      %p38 = scmp.eq.s32.totalorder %s14, 3
      %p39 = scmp.ne.s32.totalorder %s34, %s36
      %p40 = scmp.eq.s32.totalorder %s14, 0
      %p41 = por %p39, %p40
      %p42 = scmp.ne.s32.totalorder %s34, %s36
      %p43 = scmp.eq.s32.totalorder %s19, 3
      %p44 = por %p42, %p43
      %p45 = scmp.ne.s32.totalorder %s36, %s37
      %p46 = scmp.eq.s32.totalorder %s19, 0
      %p47 = por %p45, %p46
      %p48 = scmp.ne.s32.totalorder %s36, %s37
      %p49 = scmp.eq.s32.totalorder %s20, 3
      %p50 = por %p48, %p49
      %p52 = scmp.ne.s32.totalorder %s37, %s51
      %p53 = scmp.eq.s32.totalorder %s20, 0
      %p54 = por %p52, %p53
      %s55 = ssub.s32 %s21, %s33
      %s56 = ssub.s32 %s22, %s29
      %s57 = sor.u32 %s55, %s56
      %p58 = scmp.eq.s32.totalorder %s57, 0
      %s60 = sadd.s32 %s59, 1
      %s61 = scalar_select %p58, %s59, %s60
      %p64 = pneg %p58
      %p65 = scmp.eq.s32.totalorder %s14, 3
      %p66 = por %p64, %p65
      %p67 = scmp.ne.s32.totalorder %s59, %s62
      %p68 = scmp.eq.s32.totalorder %s14, 0
      %p69 = por %p67, %p68
      %p70 = scmp.ne.s32.totalorder %s59, %s62
      %p71 = scmp.eq.s32.totalorder %s19, 3
      %p72 = por %p70, %p71
      %p73 = scmp.ne.s32.totalorder %s62, %s63
      %p74 = scmp.eq.s32.totalorder %s19, 0
      %p75 = por %p73, %p74
      %p76 = scmp.ne.s32.totalorder %s62, %s63
      %p77 = scmp.eq.s32.totalorder %s20, 3
      %p78 = por %p76, %p77
      %p80 = scmp.ne.s32.totalorder %s63, %s79
      %p81 = scmp.eq.s32.totalorder %s20, 0
      %p82 = por %p80, %p81
      %s84 = sadd.s32 %s83, 1
      %p87 = scmp.eq.s32.totalorder %s14, 3
      %p88 = scmp.ne.s32.totalorder %s83, %s85
      %p89 = scmp.eq.s32.totalorder %s14, 0
      %p90 = por %p88, %p89
      %p91 = scmp.ne.s32.totalorder %s83, %s85
      %p92 = scmp.eq.s32.totalorder %s19, 3
      %p93 = por %p91, %p92
      %p94 = scmp.ne.s32.totalorder %s85, %s86
      %p95 = scmp.eq.s32.totalorder %s19, 0
      %p96 = por %p94, %p95
      %p97 = scmp.ne.s32.totalorder %s85, %s86
      %p98 = scmp.eq.s32.totalorder %s20, 3
      %p99 = por %p97, %p98
      %p101 = scmp.ne.s32.totalorder %s86, %s100
      %p102 = scmp.eq.s32.totalorder %s20, 0
      %p103 = por %p101, %p102
      %s105 = sadd.s32 %s104, 1
      %p108 = scmp.eq.s32.totalorder %s14, 3
      %p109 = scmp.ne.s32.totalorder %s104, %s106
      %p110 = scmp.eq.s32.totalorder %s14, 0
      %p111 = por %p109, %p110
      %p112 = scmp.ne.s32.totalorder %s104, %s106
      %p113 = scmp.eq.s32.totalorder %s19, 3
      %p114 = por %p112, %p113
      %p115 = scmp.ne.s32.totalorder %s106, %s107
      %p116 = scmp.eq.s32.totalorder %s19, 0
      %p117 = por %p115, %p116
      %p118 = scmp.ne.s32.totalorder %s106, %s107
      %p119 = scmp.eq.s32.totalorder %s20, 3
      %p120 = por %p118, %p119
      %p122 = scmp.ne.s32.totalorder %s107, %s121
      %p123 = scmp.eq.s32.totalorder %s20, 0
      %p124 = por %p122, %p123
      %s126 = sadd.s32 %s125, 1
      %p129 = scmp.eq.s32.totalorder %s14, 3
      %p130 = scmp.ne.s32.totalorder %s125, %s127
      %p131 = scmp.eq.s32.totalorder %s14, 0
      %p132 = por %p130, %p131
      %p133 = scmp.ne.s32.totalorder %s125, %s127
      %p134 = scmp.eq.s32.totalorder %s19, 3
      %p135 = por %p133, %p134
      %p136 = scmp.ne.s32.totalorder %s127, %s128
      %p137 = scmp.eq.s32.totalorder %s19, 0
      %p138 = por %p136, %p137
      %p139 = scmp.ne.s32.totalorder %s127, %s128
      %p140 = scmp.eq.s32.totalorder %s20, 3
      %p141 = por %p139, %p140
      %p143 = scmp.ne.s32.totalorder %s128, %s142
      %p144 = scmp.eq.s32.totalorder %s20, 0
      %p145 = por %p143, %p144
      %s147 = sadd.s32 %s146, 1
      %p150 = scmp.eq.s32.totalorder %s14, 3
      %p151 = scmp.ne.s32.totalorder %s146, %s148
      %p152 = scmp.eq.s32.totalorder %s14, 0
      %p153 = por %p151, %p152
      %p154 = scmp.ne.s32.totalorder %s146, %s148
      %p155 = scmp.eq.s32.totalorder %s19, 3
      %p156 = por %p154, %p155
      %p157 = scmp.ne.s32.totalorder %s148, %s149
      %p158 = scmp.eq.s32.totalorder %s19, 0
      %p159 = por %p157, %p158
      %p160 = scmp.ne.s32.totalorder %s148, %s149
      %p161 = scmp.eq.s32.totalorder %s20, 3
      %p162 = por %p160, %p161
      %p164 = scmp.ne.s32.totalorder %s149, %s163
      %p165 = scmp.eq.s32.totalorder %s20, 0
      %p166 = por %p164, %p165
      %s168 = sadd.s32 %s167, 1
      %p171 = scmp.eq.s32.totalorder %s14, 3
      %p172 = scmp.ne.s32.totalorder %s167, %s169
      %p173 = scmp.eq.s32.totalorder %s14, 0
      %p174 = por %p172, %p173
      %p175 = scmp.ne.s32.totalorder %s167, %s169
      %p176 = scmp.eq.s32.totalorder %s19, 3
      %p177 = por %p175, %p176
      %p178 = scmp.ne.s32.totalorder %s169, %s170
      %p179 = scmp.eq.s32.totalorder %s19, 0
      %p180 = por %p178, %p179
      %p181 = scmp.ne.s32.totalorder %s169, %s170
      %p182 = scmp.eq.s32.totalorder %s20, 3
      %p183 = por %p181, %p182
      %p185 = scmp.ne.s32.totalorder %s170, %s184
      %p186 = scmp.eq.s32.totalorder %s20, 0
      %p187 = por %p185, %p186
      %s188 = ssub.s32 %s21, %s33
      %s189 = ssub.s32 %s22, %s29
      %s190 = sor.u32 %s188, %s189
      %p191 = scmp.eq.s32.totalorder %s190, 0
      %s193 = sadd.s32 %s192, 1
      %s194 = scalar_select %p191, %s192, %s193
      %p197 = pneg %p191
      %p198 = scmp.eq.s32.totalorder %s14, 3
      %p199 = por %p197, %p198
      %p200 = scmp.ne.s32.totalorder %s192, %s195
      %p201 = scmp.eq.s32.totalorder %s14, 0
      %p202 = por %p200, %p201
      %p203 = scmp.ne.s32.totalorder %s192, %s195
      %p204 = scmp.eq.s32.totalorder %s19, 3
      %p205 = por %p203, %p204
      %p206 = scmp.ne.s32.totalorder %s195, %s196
      %p207 = scmp.eq.s32.totalorder %s19, 0
      %p208 = por %p206, %p207
      %p209 = scmp.ne.s32.totalorder %s195, %s196
      %p210 = scmp.eq.s32.totalorder %s20, 3
      %p211 = por %p209, %p210
      %p213 = scmp.ne.s32.totalorder %s196, %s212
      %p214 = scmp.eq.s32.totalorder %s20, 0
      %p215 = por %p213, %p214
      %p216 = scmp.le.s32.totalorder 1, %s14
      %p217 = scmp.lt.s32.totalorder %s14, 5
      %p218 = pnand %p216, %p217
      %p219 = pneg %p218
      // Predicated region
      $region9: #{tpu_custom_call.1} parent=5 // pred_check
        _
      $region10: #{tpu_custom_call.1} parent=5 // pred_check_branch
        %221 = sbr.rel (%p218) target = $region12
      $region11: #{tpu_custom_call.1} parent=5 // pred_region
        %s222 = ssub.s32 %s14, 1
        // Predicated region
        $region13: #{tpu_custom_call.1} parent=11 // pred_check
          %p223 = pneg %p47
        $region14: #{tpu_custom_call.1} parent=11 // pred_check_branch
          %225 = sbr.rel (%p223) target = $region16
        $region15: #{tpu_custom_call.1} parent=11 // pred_region
          %s227 = ssub.s32 16, 16
          %228 = vsyncadd [#allocation3], %s227
          %s230 = sshll.u32 %s0, 4
          %s231 = int_to_ptr.vmem [resolvable:$true] %s230
          %233 = dma.vmem_to_smem %s231, 16, [#allocation2], [#allocation3]
        $region16: #{tpu_custom_call.1} parent=11 // pred_fallthru
          _
        // Predicated region
        $region17: #{tpu_custom_call.1} parent=11 // pred_check
          %p234 = pneg %p96
        $region18: #{tpu_custom_call.1} parent=11 // pred_check_branch
          %236 = sbr.rel (%p234) target = $region20
        $region19: #{tpu_custom_call.1} parent=11 // pred_region
          _
        $region20: #{tpu_custom_call.1} parent=11 // pred_fallthru
          _
        // Predicated region
        $region21: #{tpu_custom_call.1} parent=11 // pred_check
          %p237 = pneg %p117
        $region22: #{tpu_custom_call.1} parent=11 // pred_check_branch
          %239 = sbr.rel (%p237) target = $region24
        $region23: #{tpu_custom_call.1} parent=11 // pred_region
          _
        $region24: #{tpu_custom_call.1} parent=11 // pred_fallthru
          _
        // Predicated region
        $region25: #{tpu_custom_call.1} parent=11 // pred_check
          %p240 = pneg %p138
        $region26: #{tpu_custom_call.1} parent=11 // pred_check_branch
          %242 = sbr.rel (%p240) target = $region28
        $region27: #{tpu_custom_call.1} parent=11 // pred_region
          _
        $region28: #{tpu_custom_call.1} parent=11 // pred_fallthru
          _
        // Predicated region
        $region29: #{tpu_custom_call.1} parent=11 // pred_check
          %p243 = pneg %p159
        $region30: #{tpu_custom_call.1} parent=11 // pred_check_branch
          %245 = sbr.rel (%p243) target = $region32
        $region31: #{tpu_custom_call.1} parent=11 // pred_region
          _
        $region32: #{tpu_custom_call.1} parent=11 // pred_fallthru
          _
        // Predicated region
        $region33: #{tpu_custom_call.1} parent=11 // pred_check
          %p246 = pneg %p180
        $region34: #{tpu_custom_call.1} parent=11 // pred_check_branch
          %248 = sbr.rel (%p246) target = $region36
        $region35: #{tpu_custom_call.1} parent=11 // pred_region
          _
        $region36: #{tpu_custom_call.1} parent=11 // pred_fallthru
          _
      $region12: #{tpu_custom_call.1} parent=5 // pred_fallthru
        _
      %p249 = scmp.lt.s32.totalorder %s14, 4
      // Predicated region
      $region37: #{tpu_custom_call.1} parent=5 // pred_check
        %p250 = pneg %p249
      $region38: #{tpu_custom_call.1} parent=5 // pred_check_branch
        %252 = sbr.rel (%p250) target = $region40
      $region39: #{tpu_custom_call.1} parent=5 // pred_region
        // Predicated region
        $region41: #{tpu_custom_call.1} parent=39 // pred_check
          %p253 = pneg %p69
        $region42: #{tpu_custom_call.1} parent=39 // pred_check_branch
          %255 = sbr.rel (%p253) target = $region44
        $region43: #{tpu_custom_call.1} parent=39 // pred_region
          %s256 = smul.u32 64, %s22
          %p257 = scmp.lt.s32.totalorder %s21, 3
          %s258 = scalar_select %p257, %s21, 3
          %p259 = scmp.lt.s32.totalorder %s256, 63
          %s260 = scalar_select %p259, %s256, 63
          %s261 = smul.addr %s258, 64
          %s262 = sadd.s32 %s260, %s261
          %s263 = smul.addr %s262, 4
          %s264 = scalar_lea.vmem %s1, %s263
          %s265 = smul.u32 64, %s22
        $region44: #{tpu_custom_call.1} parent=39 // pred_fallthru
          _
      $region40: #{tpu_custom_call.1} parent=5 // pred_fallthru
        _
      %p266 = scmp.le.s32.totalorder 1, %s14
      %p267 = scmp.lt.s32.totalorder %s14, 5
      %p268 = pnand %p266, %p267
      %p269 = pneg %p268
      // Predicated region
      $region45: #{tpu_custom_call.1} parent=5 // pred_check
        _
      $region46: #{tpu_custom_call.1} parent=5 // pred_check_branch
        %271 = sbr.rel (%p268) target = $region48
      $region47: #{tpu_custom_call.1} parent=5 // pred_region
        %s272 = ssub.s32 %s14, 1
        // Predicated region
        $region49: #{tpu_custom_call.1} parent=47 // pred_check
          %p273 = pneg %p47
        $region50: #{tpu_custom_call.1} parent=47 // pred_check_branch
          %275 = sbr.rel (%p273) target = $region52
        $region51: #{tpu_custom_call.1} parent=47 // pred_region
          %276 = dma.done [#allocation3], 16
        $region52: #{tpu_custom_call.1} parent=47 // pred_fallthru
          _
        %277 = sfence
        %p278 = pneg %p47
        %p279 = pneg %p44
        %s280 = smul.u32 64, %s24
        %p281 = scmp.lt.s32.totalorder %s23, 3
        %s282 = scalar_select %p281, %s23, 3
        %p283 = scmp.lt.s32.totalorder %s280, 63
        %s284 = scalar_select %p283, %s280, 63
        %s285 = smul.addr %s282, 64
        %s286 = sadd.s32 %s284, %s285
        %s287 = smul.addr %s286, 4
        %s288 = scalar_lea.vmem %s1, %s287
        %p289 = pneg %p75
        %p290 = pneg %p72
        %p291 = pneg %p96
        %p292 = pneg %p93
        %p293 = pneg %p117
        %p294 = pneg %p114
        %p295 = pneg %p138
        %p296 = pneg %p135
        %p297 = pneg %p159
        %p298 = pneg %p156
        %p299 = pneg %p180
        %p300 = pneg %p177
        %p301 = pneg %p208
        %p302 = pneg %p205
        %s303 = smul.u32 64, %s24
        %p304 = scmp.lt.s32.totalorder %s23, 3
        %s305 = scalar_select %p304, %s23, 3
        %p306 = scmp.lt.s32.totalorder %s303, 63
        %s307 = scalar_select %p306, %s303, 63
        %s308 = smul.addr %s305, 64
        %s309 = sadd.s32 %s307, %s308
        %s310 = smul.addr %s309, 4
        %s311 = scalar_lea.vmem %s7, %s310
        %s312 = smul.u32 64, %s24
        %p313 = scmp.lt.s32.totalorder %s23, 3
        %s314 = scalar_select %p313, %s23, 3
        %p315 = scmp.lt.s32.totalorder %s312, 63
        %s316 = scalar_select %p315, %s312, 63
        %s317 = smul.addr %s314, 64
        %s318 = sadd.s32 %s316, %s317
        %s319 = smul.addr %s318, 4
        %s320 = scalar_lea.vmem %s1, %s319
        %s321 = smul.u32 64, %s24
        %s322 = smul.u32 64, %s24
        %p323 = scmp.lt.s32.totalorder %s23, 3
        %s324 = scalar_select %p323, %s23, 3
        %p325 = scmp.lt.s32.totalorder %s322, 63
        %s326 = scalar_select %p325, %s322, 63
        %s327 = smul.addr %s324, 64
        %s328 = sadd.s32 %s326, %s327
        %s329 = smul.addr %s328, 4
        %s330 = scalar_lea.vmem %s7, %s329
        %s331 = smul.u32 64, %s24
        %s333 = sld [smem:[#allocation2 + %s23]]
        %v334 = vld [vmem:[%s3] sm:$0x1]
        %v335 = vld [vmem:[%s4] sm:$0x1]
        %v336 = vstv %s333
        %v337 = vmul.f32 %v336, %v335
        %v338 = vadd.f32 %v334, %v337
        %v339 = vld [vmem:[%s320] sm:$0xf]
        %v340 = vld [vmem:[%s320 + $0x4] sm:$0xf]
        %v341 = vld [vmem:[%s320 + $0x8] sm:$0xf]
        %v342 = vld [vmem:[%s320 + $0xc] sm:$0xf]
        %v343 = vld [vmem:[%s320 + $0x10] sm:$0xf]
        %v344 = vld [vmem:[%s320 + $0x14] sm:$0xf]
        %v345 = vld [vmem:[%s320 + $0x18] sm:$0xf]
        %v346 = vld [vmem:[%s320 + $0x1c] sm:$0xf]
        %v347 = vld [vmem:[%s320 + $0x20] sm:$0xf]
        %v348 = vld [vmem:[%s320 + $0x24] sm:$0xf]
        %v349 = vld [vmem:[%s320 + $0x28] sm:$0xf]
        %v350 = vld [vmem:[%s320 + $0x2c] sm:$0xf]
        %v351 = vld [vmem:[%s320 + $0x30] sm:$0xf]
        %v352 = vld [vmem:[%s320 + $0x34] sm:$0xf]
        %v353 = vld [vmem:[%s320 + $0x38] sm:$0xf]
        %v354 = vld [vmem:[%s320 + $0x3c] sm:$0xf]
        %v355 = vld [vmem:[%s320 + $0x40] sm:$0xf]
        %v356 = vld [vmem:[%s320 + $0x44] sm:$0xf]
        %v357 = vld [vmem:[%s320 + $0x48] sm:$0xf]
        %v358 = vld [vmem:[%s320 + $0x4c] sm:$0xf]
        %v359 = vld [vmem:[%s320 + $0x50] sm:$0xf]
        %v360 = vld [vmem:[%s320 + $0x54] sm:$0xf]
        %v361 = vld [vmem:[%s320 + $0x58] sm:$0xf]
        %v362 = vld [vmem:[%s320 + $0x5c] sm:$0xf]
        %v363 = vld [vmem:[%s320 + $0x60] sm:$0xf]
        %v364 = vld [vmem:[%s320 + $0x64] sm:$0xf]
        %v365 = vld [vmem:[%s320 + $0x68] sm:$0xf]
        %v366 = vld [vmem:[%s320 + $0x6c] sm:$0xf]
        %v367 = vld [vmem:[%s320 + $0x70] sm:$0xf]
        %v368 = vld [vmem:[%s320 + $0x74] sm:$0xf]
        %v369 = vld [vmem:[%s320 + $0x78] sm:$0xf]
        %v370 = vld [vmem:[%s320 + $0x7c] sm:$0xf]
        %v371 = vld [vmem:[%s320 + $0x80] sm:$0xf]
        %v372 = vld [vmem:[%s320 + $0x84] sm:$0xf]
        %v373 = vld [vmem:[%s320 + $0x88] sm:$0xf]
        %v374 = vld [vmem:[%s320 + $0x8c] sm:$0xf]
        %v375 = vld [vmem:[%s320 + $0x90] sm:$0xf]
        %v376 = vld [vmem:[%s320 + $0x94] sm:$0xf]
        %v377 = vld [vmem:[%s320 + $0x98] sm:$0xf]
        %v378 = vld [vmem:[%s320 + $0x9c] sm:$0xf]
        %v379 = vld [vmem:[%s320 + $0xa0] sm:$0xf]
        %v380 = vld [vmem:[%s320 + $0xa4] sm:$0xf]
        %v381 = vld [vmem:[%s320 + $0xa8] sm:$0xf]
        %v382 = vld [vmem:[%s320 + $0xac] sm:$0xf]
        %v383 = vld [vmem:[%s320 + $0xb0] sm:$0xf]
        %v384 = vld [vmem:[%s320 + $0xb4] sm:$0xf]
        %v385 = vld [vmem:[%s320 + $0xb8] sm:$0xf]
        %v386 = vld [vmem:[%s320 + $0xbc] sm:$0xf]
        %v387 = vld [vmem:[%s320 + $0xc0] sm:$0xf]
        %v388 = vld [vmem:[%s320 + $0xc4] sm:$0xf]
        %v389 = vld [vmem:[%s320 + $0xc8] sm:$0xf]
        %v390 = vld [vmem:[%s320 + $0xcc] sm:$0xf]
        %v391 = vld [vmem:[%s320 + $0xd0] sm:$0xf]
        %v392 = vld [vmem:[%s320 + $0xd4] sm:$0xf]
        %v393 = vld [vmem:[%s320 + $0xd8] sm:$0xf]
        %v394 = vld [vmem:[%s320 + $0xdc] sm:$0xf]
        %v395 = vld [vmem:[%s320 + $0xe0] sm:$0xf]
        %v396 = vld [vmem:[%s320 + $0xe4] sm:$0xf]
        %v397 = vld [vmem:[%s320 + $0xe8] sm:$0xf]
        %v398 = vld [vmem:[%s320 + $0xec] sm:$0xf]
        %v399 = vld [vmem:[%s320 + $0xf0] sm:$0xf]
        %v400 = vld [vmem:[%s320 + $0xf4] sm:$0xf]
        %v401 = vld [vmem:[%s320 + $0xf8] sm:$0xf]
        %v402 = vld [vmem:[%s320 + $0xfc] sm:$0xf]
        %v403 = vld [vmem:[%s2] sm:$0xf]
        %v404 = vld [vmem:[%s2 + $0x4] sm:$0xf]
        %v405 = vld [vmem:[%s2 + $0x8] sm:$0xf]
        %v406 = vld [vmem:[%s2 + $0xc] sm:$0xf]
        %v408 = vlaneseq
        %v409 = vshrl.u32 %v408, 7
        %v410 = vsub.s32 0, %v409
        %v411 = vrot.slane %v338, %v410
        %v477 = vunpack.c.l.b16 %v339
        %v478 = vunpack.c.l.b16 %v340
        %v479 = vunpack.c.l.b16 %v341
        %v480 = vunpack.c.l.b16 %v342
        %v481 = vunpack.c.l.b16 %v343
        %v482 = vunpack.c.l.b16 %v344
        %v483 = vunpack.c.l.b16 %v345
        %v484 = vunpack.c.l.b16 %v346
        %v485 = vunpack.c.l.b16 %v347
        %v486 = vunpack.c.l.b16 %v348
        %v487 = vunpack.c.l.b16 %v349
        %v488 = vunpack.c.l.b16 %v350
        %v489 = vunpack.c.l.b16 %v351
        %v490 = vunpack.c.l.b16 %v352
        %v491 = vunpack.c.l.b16 %v353
        %v492 = vunpack.c.l.b16 %v354
        %v493 = vunpack.c.l.b16 %v355
        %v494 = vunpack.c.l.b16 %v356
        %v495 = vunpack.c.l.b16 %v357
        %v496 = vunpack.c.l.b16 %v358
        %v497 = vunpack.c.l.b16 %v359
        %v498 = vunpack.c.l.b16 %v360
        %v499 = vunpack.c.l.b16 %v361
        %v500 = vunpack.c.l.b16 %v362
        %v501 = vunpack.c.l.b16 %v363
        %v502 = vunpack.c.l.b16 %v364
        %v503 = vunpack.c.l.b16 %v365
        %v504 = vunpack.c.l.b16 %v366
        %v505 = vunpack.c.l.b16 %v367
        %v506 = vunpack.c.l.b16 %v368
        %v507 = vunpack.c.l.b16 %v369
        %v508 = vunpack.c.l.b16 %v370
        %v509 = vunpack.c.l.b16 %v371
        %v510 = vunpack.c.l.b16 %v372
        %v511 = vunpack.c.l.b16 %v373
        %v512 = vunpack.c.l.b16 %v374
        %v513 = vunpack.c.l.b16 %v375
        %v514 = vunpack.c.l.b16 %v376
        %v515 = vunpack.c.l.b16 %v377
        %v516 = vunpack.c.l.b16 %v378
        %v517 = vunpack.c.l.b16 %v379
        %v518 = vunpack.c.l.b16 %v380
        %v519 = vunpack.c.l.b16 %v381
        %v520 = vunpack.c.l.b16 %v382
        %v521 = vunpack.c.l.b16 %v383
        %v522 = vunpack.c.l.b16 %v384
        %v523 = vunpack.c.l.b16 %v385
        %v524 = vunpack.c.l.b16 %v386
        %v525 = vunpack.c.l.b16 %v387
        %v526 = vunpack.c.l.b16 %v388
        %v527 = vunpack.c.l.b16 %v389
        %v528 = vunpack.c.l.b16 %v390
        %v529 = vunpack.c.l.b16 %v391
        %v530 = vunpack.c.l.b16 %v392
        %v531 = vunpack.c.l.b16 %v393
        %v532 = vunpack.c.l.b16 %v394
        %v533 = vunpack.c.l.b16 %v395
        %v534 = vunpack.c.l.b16 %v396
        %v535 = vunpack.c.l.b16 %v397
        %v536 = vunpack.c.l.b16 %v398
        %v537 = vunpack.c.l.b16 %v399
        %v538 = vunpack.c.l.b16 %v400
        %v539 = vunpack.c.l.b16 %v401
        %v540 = vunpack.c.l.b16 %v402
        %v541 = vpack.c.b16 %v478, %v477
        %v542 = vpack.c.b16 %v480, %v479
        %v543 = vpack.c.b16 %v482, %v481
        %v544 = vpack.c.b16 %v484, %v483
        %v545 = vpack.c.b16 %v486, %v485
        %v546 = vpack.c.b16 %v488, %v487
        %v547 = vpack.c.b16 %v490, %v489
        %v548 = vpack.c.b16 %v492, %v491
        %v549 = vpack.c.b16 %v494, %v493
        %v550 = vpack.c.b16 %v496, %v495
        %v551 = vpack.c.b16 %v498, %v497
        %v552 = vpack.c.b16 %v500, %v499
        %v553 = vpack.c.b16 %v502, %v501
        %v554 = vpack.c.b16 %v504, %v503
        %v555 = vpack.c.b16 %v506, %v505
        %v556 = vpack.c.b16 %v508, %v507
        %v557 = vpack.c.b16 %v510, %v509
        %v558 = vpack.c.b16 %v512, %v511
        %v559 = vpack.c.b16 %v514, %v513
        %v560 = vpack.c.b16 %v516, %v515
        %v561 = vpack.c.b16 %v518, %v517
        %v562 = vpack.c.b16 %v520, %v519
        %v563 = vpack.c.b16 %v522, %v521
        %v564 = vpack.c.b16 %v524, %v523
        %v565 = vpack.c.b16 %v526, %v525
        %v566 = vpack.c.b16 %v528, %v527
        %v567 = vpack.c.b16 %v530, %v529
        %v568 = vpack.c.b16 %v532, %v531
        %v569 = vpack.c.b16 %v534, %v533
        %v570 = vpack.c.b16 %v536, %v535
        %v571 = vpack.c.b16 %v538, %v537
        %v572 = vpack.c.b16 %v540, %v539
        %v577 = vunpack.c.l.b16 %v403
        %v578 = vunpack.c.l.b16 %v404
        %v579 = vunpack.c.l.b16 %v405
        %v580 = vunpack.c.l.b16 %v406
        %v581 = vpack.c.b16 %v578, %v577
        %v582 = vpack.c.b16 %v580, %v579
        %vm585 = vcmask 261120
        %v587 = vsel %vm585, %v541, 0
        %v590 = vsel %vm585, %v542, 0
        %v593 = vsel %vm585, %v543, 0
        %v596 = vsel %vm585, %v544, 0
        %v599 = vsel %vm585, %v545, 0
        %v602 = vsel %vm585, %v546, 0
        %v605 = vsel %vm585, %v547, 0
        %v608 = vsel %vm585, %v548, 0
        %v611 = vsel %vm585, %v549, 0
        %v614 = vsel %vm585, %v550, 0
        %v617 = vsel %vm585, %v551, 0
        %v620 = vsel %vm585, %v552, 0
        %v623 = vsel %vm585, %v553, 0
        %v626 = vsel %vm585, %v554, 0
        %v629 = vsel %vm585, %v555, 0
        %v632 = vsel %vm585, %v556, 0
        %v635 = vsel %vm585, %v557, 0
        %v638 = vsel %vm585, %v558, 0
        %v641 = vsel %vm585, %v559, 0
        %v644 = vsel %vm585, %v560, 0
        %v647 = vsel %vm585, %v561, 0
        %v650 = vsel %vm585, %v562, 0
        %v653 = vsel %vm585, %v563, 0
        %v656 = vsel %vm585, %v564, 0
        %v659 = vsel %vm585, %v565, 0
        %v662 = vsel %vm585, %v566, 0
        %v665 = vsel %vm585, %v567, 0
        %v668 = vsel %vm585, %v568, 0
        %v671 = vsel %vm585, %v569, 0
        %v674 = vsel %vm585, %v570, 0
        %v677 = vsel %vm585, %v571, 0
        %v680 = vsel %vm585, %v572, 0
        %682 = vmatprep.subr.bf16.mxu0 0
        %683 = vmatpush1.bf16.msra.mxu0 0
        %684 = vmatprep.subr.bf16.mxu0 0
        %685 = vmatpush1.bf16.msra.mxu0 0
        %686 = vmatprep.subr.bf16.mxu0 0
        %687 = vmatpush1.bf16.msra.mxu0 0
        %688 = vmatprep.subr.bf16.mxu0 0
        %689 = vmatpush1.bf16.msra.mxu0 0
        %690 = vmatprep.subr.bf16.mxu0 0
        %691 = vmatpush1.bf16.msra.mxu0 0
        %692 = vmatprep.subr.bf16.mxu0 0
        %693 = vmatpush1.bf16.msra.mxu0 0
        %694 = vmatprep.subr.bf16.mxu0 0
        %695 = vmatpush1.bf16.msra.mxu0 %v582
        %696 = vmatprep.subr.bf16.mxu0 0
        %697 = vmatpush1.bf16.msra.mxu0 %v581
        %698 = vmatprep.subr.bf16.mxu0 0
        %699 = vmatpush2.bf16.msra.mxu0 0
        %700 = vmatprep.subr.bf16.mxu0 0
        %701 = vmatpush2.bf16.msra.mxu0 0
        %702 = vmatprep.subr.bf16.mxu0 0
        %703 = vmatpush2.bf16.msra.mxu0 0
        %704 = vmatprep.subr.bf16.mxu0 0
        %705 = vmatpush2.bf16.msra.mxu0 0
        %706 = vmatprep.subr.bf16.mxu0 0
        %707 = vmatpush2.bf16.msra.mxu0 0
        %708 = vmatprep.subr.bf16.mxu0 0
        %709 = vmatpush2.bf16.msra.mxu0 0
        %710 = vmatprep.subr.bf16.mxu0 0
        %711 = vmatpush2.bf16.msra.mxu0 0
        %712 = vmatprep.subr.bf16.mxu0 0
        %713 = vmatpush2.bf16.msra.mxu0 0
        %714 = vmatprep.mubr.bf16.mxu0 0
        %715 = vmatmul.mubr.bf16.gmra.mxu0 %v587
        %v716 = vpop.f32.mrf.mxu0
        %v717 = vadd.f32 %v411, %v716
        %v718 = vpop.f32.mrf.mxu0
        %v719 = vpop.f32.mrf.mxu0
        %v720 = vadd.f32 %v411, %v719
        %v721 = vpop.f32.mrf.mxu0
        %722 = vmatprep.mubr.bf16.mxu0 0
        %723 = vmatmul.mubr.bf16.gmra.mxu0 %v590
        %v724 = vpop.f32.mrf.mxu0
        %v725 = vadd.f32 %v411, %v724
        %v726 = vpop.f32.mrf.mxu0
        %v727 = vpop.f32.mrf.mxu0
        %v728 = vadd.f32 %v411, %v727
        %v729 = vpop.f32.mrf.mxu0
        %730 = vmatprep.mubr.bf16.mxu0 0
        %731 = vmatmul.mubr.bf16.gmra.mxu0 %v593
        %v732 = vpop.f32.mrf.mxu0
        %v733 = vadd.f32 %v411, %v732
        %v734 = vpop.f32.mrf.mxu0
        %v735 = vpop.f32.mrf.mxu0
        %v736 = vadd.f32 %v411, %v735
        %v737 = vpop.f32.mrf.mxu0
        %738 = vmatprep.mubr.bf16.mxu0 0
        %739 = vmatmul.mubr.bf16.gmra.mxu0 %v596
        %v740 = vpop.f32.mrf.mxu0
        %v741 = vadd.f32 %v411, %v740
        %v742 = vpop.f32.mrf.mxu0
        %v743 = vpop.f32.mrf.mxu0
        %v744 = vadd.f32 %v411, %v743
        %v745 = vpop.f32.mrf.mxu0
        %746 = vmatprep.mubr.bf16.mxu0 0
        %747 = vmatmul.mubr.bf16.gmra.mxu0 %v599
        %v748 = vpop.f32.mrf.mxu0
        %v749 = vadd.f32 %v411, %v748
        %v750 = vpop.f32.mrf.mxu0
        %v751 = vpop.f32.mrf.mxu0
        %v752 = vadd.f32 %v411, %v751
        %v753 = vpop.f32.mrf.mxu0
        %754 = vmatprep.mubr.bf16.mxu0 0
        %755 = vmatmul.mubr.bf16.gmra.mxu0 %v602
        %v756 = vpop.f32.mrf.mxu0
        %v757 = vadd.f32 %v411, %v756
        %v758 = vpop.f32.mrf.mxu0
        %v759 = vpop.f32.mrf.mxu0
        %v760 = vadd.f32 %v411, %v759
        %v761 = vpop.f32.mrf.mxu0
        %762 = vmatprep.mubr.bf16.mxu0 0
        %763 = vmatmul.mubr.bf16.gmra.mxu0 %v605
        %v764 = vpop.f32.mrf.mxu0
        %v765 = vadd.f32 %v411, %v764
        %v766 = vpop.f32.mrf.mxu0
        %v767 = vpop.f32.mrf.mxu0
        %v768 = vadd.f32 %v411, %v767
        %v769 = vpop.f32.mrf.mxu0
        %770 = vmatprep.mubr.bf16.mxu0 0
        %771 = vmatmul.mubr.bf16.gmra.mxu0 %v608
        %v772 = vpop.f32.mrf.mxu0
        %v773 = vadd.f32 %v411, %v772
        %v774 = vpop.f32.mrf.mxu0
        %v775 = vpop.f32.mrf.mxu0
        %v776 = vadd.f32 %v411, %v775
        %v777 = vpop.f32.mrf.mxu0
        %778 = vmatprep.mubr.bf16.mxu0 0
        %779 = vmatmul.mubr.bf16.gmra.mxu0 %v611
        %v780 = vpop.f32.mrf.mxu0
        %v781 = vadd.f32 %v411, %v780
        %v782 = vpop.f32.mrf.mxu0
        %v783 = vpop.f32.mrf.mxu0
        %v784 = vadd.f32 %v411, %v783
        %v785 = vpop.f32.mrf.mxu0
        %786 = vmatprep.mubr.bf16.mxu0 0
        %787 = vmatmul.mubr.bf16.gmra.mxu0 %v614
        %v788 = vpop.f32.mrf.mxu0
        %v789 = vadd.f32 %v411, %v788
        %v790 = vpop.f32.mrf.mxu0
        %v791 = vpop.f32.mrf.mxu0
        %v792 = vadd.f32 %v411, %v791
        %v793 = vpop.f32.mrf.mxu0
        %794 = vmatprep.mubr.bf16.mxu0 0
        %795 = vmatmul.mubr.bf16.gmra.mxu0 %v617
        %v796 = vpop.f32.mrf.mxu0
        %v797 = vadd.f32 %v411, %v796
        %v798 = vpop.f32.mrf.mxu0
        %v799 = vpop.f32.mrf.mxu0
        %v800 = vadd.f32 %v411, %v799
        %v801 = vpop.f32.mrf.mxu0
        %802 = vmatprep.mubr.bf16.mxu0 0
        %803 = vmatmul.mubr.bf16.gmra.mxu0 %v620
        %v804 = vpop.f32.mrf.mxu0
        %v805 = vadd.f32 %v411, %v804
        %v806 = vpop.f32.mrf.mxu0
        %v807 = vpop.f32.mrf.mxu0
        %v808 = vadd.f32 %v411, %v807
        %v809 = vpop.f32.mrf.mxu0
        %810 = vmatprep.mubr.bf16.mxu0 0
        %811 = vmatmul.mubr.bf16.gmra.mxu0 %v623
        %v812 = vpop.f32.mrf.mxu0
        %v813 = vadd.f32 %v411, %v812
        %v814 = vpop.f32.mrf.mxu0
        %v815 = vpop.f32.mrf.mxu0
        %v816 = vadd.f32 %v411, %v815
        %v817 = vpop.f32.mrf.mxu0
        %818 = vmatprep.mubr.bf16.mxu0 0
        %819 = vmatmul.mubr.bf16.gmra.mxu0 %v626
        %v820 = vpop.f32.mrf.mxu0
        %v821 = vadd.f32 %v411, %v820
        %v822 = vpop.f32.mrf.mxu0
        %v823 = vpop.f32.mrf.mxu0
        %v824 = vadd.f32 %v411, %v823
        %v825 = vpop.f32.mrf.mxu0
        %826 = vmatprep.mubr.bf16.mxu0 0
        %827 = vmatmul.mubr.bf16.gmra.mxu0 %v629
        %v828 = vpop.f32.mrf.mxu0
        %v829 = vadd.f32 %v411, %v828
        %v830 = vpop.f32.mrf.mxu0
        %v831 = vpop.f32.mrf.mxu0
        %v832 = vadd.f32 %v411, %v831
        %v833 = vpop.f32.mrf.mxu0
        %834 = vmatprep.mubr.bf16.mxu0 0
        %835 = vmatmul.mubr.bf16.gmra.mxu0 %v632
        %v836 = vpop.f32.mrf.mxu0
        %v837 = vadd.f32 %v411, %v836
        %v838 = vpop.f32.mrf.mxu0
        %v839 = vpop.f32.mrf.mxu0
        %v840 = vadd.f32 %v411, %v839
        %v841 = vpop.f32.mrf.mxu0
        %842 = vmatprep.mubr.bf16.mxu0 0
        %843 = vmatmul.mubr.bf16.gmra.mxu0 %v635
        %v844 = vpop.f32.mrf.mxu0
        %v845 = vadd.f32 %v411, %v844
        %v846 = vpop.f32.mrf.mxu0
        %v847 = vpop.f32.mrf.mxu0
        %v848 = vadd.f32 %v411, %v847
        %v849 = vpop.f32.mrf.mxu0
        %850 = vmatprep.mubr.bf16.mxu0 0
        %851 = vmatmul.mubr.bf16.gmra.mxu0 %v638
        %v852 = vpop.f32.mrf.mxu0
        %v853 = vadd.f32 %v411, %v852
        %v854 = vpop.f32.mrf.mxu0
        %v855 = vpop.f32.mrf.mxu0
        %v856 = vadd.f32 %v411, %v855
        %v857 = vpop.f32.mrf.mxu0
        %858 = vmatprep.mubr.bf16.mxu0 0
        %859 = vmatmul.mubr.bf16.gmra.mxu0 %v641
        %v860 = vpop.f32.mrf.mxu0
        %v861 = vadd.f32 %v411, %v860
        %v862 = vpop.f32.mrf.mxu0
        %v863 = vpop.f32.mrf.mxu0
        %v864 = vadd.f32 %v411, %v863
        %v865 = vpop.f32.mrf.mxu0
        %866 = vmatprep.mubr.bf16.mxu0 0
        %867 = vmatmul.mubr.bf16.gmra.mxu0 %v644
        %v868 = vpop.f32.mrf.mxu0
        %v869 = vadd.f32 %v411, %v868
        %v870 = vpop.f32.mrf.mxu0
        %v871 = vpop.f32.mrf.mxu0
        %v872 = vadd.f32 %v411, %v871
        %v873 = vpop.f32.mrf.mxu0
        %874 = vmatprep.mubr.bf16.mxu0 0
        %875 = vmatmul.mubr.bf16.gmra.mxu0 %v647
        %v876 = vpop.f32.mrf.mxu0
        %v877 = vadd.f32 %v411, %v876
        %v878 = vpop.f32.mrf.mxu0
        %v879 = vpop.f32.mrf.mxu0
        %v880 = vadd.f32 %v411, %v879
        %v881 = vpop.f32.mrf.mxu0
        %882 = vmatprep.mubr.bf16.mxu0 0
        %883 = vmatmul.mubr.bf16.gmra.mxu0 %v650
        %v884 = vpop.f32.mrf.mxu0
        %v885 = vadd.f32 %v411, %v884
        %v886 = vpop.f32.mrf.mxu0
        %v887 = vpop.f32.mrf.mxu0
        %v888 = vadd.f32 %v411, %v887
        %v889 = vpop.f32.mrf.mxu0
        %890 = vmatprep.mubr.bf16.mxu0 0
        %891 = vmatmul.mubr.bf16.gmra.mxu0 %v653
        %v892 = vpop.f32.mrf.mxu0
        %v893 = vadd.f32 %v411, %v892
        %v894 = vpop.f32.mrf.mxu0
        %v895 = vpop.f32.mrf.mxu0
        %v896 = vadd.f32 %v411, %v895
        %v897 = vpop.f32.mrf.mxu0
        %898 = vmatprep.mubr.bf16.mxu0 0
        %899 = vmatmul.mubr.bf16.gmra.mxu0 %v656
        %v900 = vpop.f32.mrf.mxu0
        %v901 = vadd.f32 %v411, %v900
        %v902 = vpop.f32.mrf.mxu0
        %v903 = vpop.f32.mrf.mxu0
        %v904 = vadd.f32 %v411, %v903
        %v905 = vpop.f32.mrf.mxu0
        %906 = vmatprep.mubr.bf16.mxu0 0
        %907 = vmatmul.mubr.bf16.gmra.mxu0 %v659
        %v908 = vpop.f32.mrf.mxu0
        %v909 = vadd.f32 %v411, %v908
        %v910 = vpop.f32.mrf.mxu0
        %v911 = vpop.f32.mrf.mxu0
        %v912 = vadd.f32 %v411, %v911
        %v913 = vpop.f32.mrf.mxu0
        %914 = vmatprep.mubr.bf16.mxu0 0
        %915 = vmatmul.mubr.bf16.gmra.mxu0 %v662
        %v916 = vpop.f32.mrf.mxu0
        %v917 = vadd.f32 %v411, %v916
        %v918 = vpop.f32.mrf.mxu0
        %v919 = vpop.f32.mrf.mxu0
        %v920 = vadd.f32 %v411, %v919
        %v921 = vpop.f32.mrf.mxu0
        %922 = vmatprep.mubr.bf16.mxu0 0
        %923 = vmatmul.mubr.bf16.gmra.mxu0 %v665
        %v924 = vpop.f32.mrf.mxu0
        %v925 = vadd.f32 %v411, %v924
        %v926 = vpop.f32.mrf.mxu0
        %v927 = vpop.f32.mrf.mxu0
        %v928 = vadd.f32 %v411, %v927
        %v929 = vpop.f32.mrf.mxu0
        %930 = vmatprep.mubr.bf16.mxu0 0
        %931 = vmatmul.mubr.bf16.gmra.mxu0 %v668
        %v932 = vpop.f32.mrf.mxu0
        %v933 = vadd.f32 %v411, %v932
        %v934 = vpop.f32.mrf.mxu0
        %v935 = vpop.f32.mrf.mxu0
        %v936 = vadd.f32 %v411, %v935
        %v937 = vpop.f32.mrf.mxu0
        %938 = vmatprep.mubr.bf16.mxu0 0
        %939 = vmatmul.mubr.bf16.gmra.mxu0 %v671
        %v940 = vpop.f32.mrf.mxu0
        %v941 = vadd.f32 %v411, %v940
        %v942 = vpop.f32.mrf.mxu0
        %v943 = vpop.f32.mrf.mxu0
        %v944 = vadd.f32 %v411, %v943
        %v945 = vpop.f32.mrf.mxu0
        %946 = vmatprep.mubr.bf16.mxu0 0
        %947 = vmatmul.mubr.bf16.gmra.mxu0 %v674
        %v948 = vpop.f32.mrf.mxu0
        %v949 = vadd.f32 %v411, %v948
        %v950 = vpop.f32.mrf.mxu0
        %v951 = vpop.f32.mrf.mxu0
        %v952 = vadd.f32 %v411, %v951
        %v953 = vpop.f32.mrf.mxu0
        %954 = vmatprep.mubr.bf16.mxu0 0
        %955 = vmatmul.mubr.bf16.gmra.mxu0 %v677
        %v956 = vpop.f32.mrf.mxu0
        %v957 = vadd.f32 %v411, %v956
        %v958 = vpop.f32.mrf.mxu0
        %v959 = vpop.f32.mrf.mxu0
        %v960 = vadd.f32 %v411, %v959
        %v961 = vpop.f32.mrf.mxu0
        %962 = vmatprep.mubr.bf16.mxu0 0
        %963 = vmatmul.mubr.bf16.gmra.mxu0 %v680
        %v964 = vpop.f32.mrf.mxu0
        %v965 = vadd.f32 %v411, %v964
        %v966 = vpop.f32.mrf.mxu0
        %v967 = vpop.f32.mrf.mxu0
        %v968 = vadd.f32 %v411, %v967
        %v969 = vpop.f32.mrf.mxu0
        %970 = vdwg.mxu0
        %v971 = vtanh.pop %v717
        %v972 = vtanh.pop %v720
        %v973 = vtanh.pop %v725
        %v974 = vtanh.pop %v728
        %v975 = vtanh.pop %v733
        %v976 = vtanh.pop %v736
        %v977 = vtanh.pop %v741
        %v978 = vtanh.pop %v744
        %v979 = vtanh.pop %v749
        %v980 = vtanh.pop %v752
        %v981 = vtanh.pop %v757
        %v982 = vtanh.pop %v760
        %v983 = vtanh.pop %v765
        %v984 = vtanh.pop %v768
        %v985 = vtanh.pop %v773
        %v986 = vtanh.pop %v776
        %v987 = vtanh.pop %v781
        %v988 = vtanh.pop %v784
        %v989 = vtanh.pop %v789
        %v990 = vtanh.pop %v792
        %v991 = vtanh.pop %v797
        %v992 = vtanh.pop %v800
        %v993 = vtanh.pop %v805
        %v994 = vtanh.pop %v808
        %v995 = vtanh.pop %v813
        %v996 = vtanh.pop %v816
        %v997 = vtanh.pop %v821
        %v998 = vtanh.pop %v824
        %v999 = vtanh.pop %v829
        %v1000 = vtanh.pop %v832
        %v1001 = vtanh.pop %v837
        %v1002 = vtanh.pop %v840
        %v1003 = vtanh.pop %v845
        %v1004 = vtanh.pop %v848
        %v1005 = vtanh.pop %v853
        %v1006 = vtanh.pop %v856
        %v1007 = vtanh.pop %v861
        %v1008 = vtanh.pop %v864
        %v1009 = vtanh.pop %v869
        %v1010 = vtanh.pop %v872
        %v1011 = vtanh.pop %v877
        %v1012 = vtanh.pop %v880
        %v1013 = vtanh.pop %v885
        %v1014 = vtanh.pop %v888
        %v1015 = vtanh.pop %v893
        %v1016 = vtanh.pop %v896
        %v1017 = vtanh.pop %v901
        %v1018 = vtanh.pop %v904
        %v1019 = vtanh.pop %v909
        %v1020 = vtanh.pop %v912
        %v1021 = vtanh.pop %v917
        %v1022 = vtanh.pop %v920
        %v1023 = vtanh.pop %v925
        %v1024 = vtanh.pop %v928
        %v1025 = vtanh.pop %v933
        %v1026 = vtanh.pop %v936
        %v1027 = vtanh.pop %v941
        %v1028 = vtanh.pop %v944
        %v1029 = vtanh.pop %v949
        %v1030 = vtanh.pop %v952
        %v1031 = vtanh.pop %v957
        %v1032 = vtanh.pop %v960
        %v1033 = vtanh.pop %v965
        %v1034 = vtanh.pop %v968
        %v1035 = vpack.c.bf16 %v972, %v971
        %v1036 = vpack.c.bf16 %v974, %v973
        %v1037 = vpack.c.bf16 %v976, %v975
        %v1038 = vpack.c.bf16 %v978, %v977
        %v1039 = vpack.c.bf16 %v980, %v979
        %v1040 = vpack.c.bf16 %v982, %v981
        %v1041 = vpack.c.bf16 %v984, %v983
        %v1042 = vpack.c.bf16 %v986, %v985
        %v1043 = vpack.c.bf16 %v988, %v987
        %v1044 = vpack.c.bf16 %v990, %v989
        %v1045 = vpack.c.bf16 %v992, %v991
        %v1046 = vpack.c.bf16 %v994, %v993
        %v1047 = vpack.c.bf16 %v996, %v995
        %v1048 = vpack.c.bf16 %v998, %v997
        %v1049 = vpack.c.bf16 %v1000, %v999
        %v1050 = vpack.c.bf16 %v1002, %v1001
        %v1051 = vpack.c.bf16 %v1004, %v1003
        %v1052 = vpack.c.bf16 %v1006, %v1005
        %v1053 = vpack.c.bf16 %v1008, %v1007
        %v1054 = vpack.c.bf16 %v1010, %v1009
        %v1055 = vpack.c.bf16 %v1012, %v1011
        %v1056 = vpack.c.bf16 %v1014, %v1013
        %v1057 = vpack.c.bf16 %v1016, %v1015
        %v1058 = vpack.c.bf16 %v1018, %v1017
        %v1059 = vpack.c.bf16 %v1020, %v1019
        %v1060 = vpack.c.bf16 %v1022, %v1021
        %v1061 = vpack.c.bf16 %v1024, %v1023
        %v1062 = vpack.c.bf16 %v1026, %v1025
        %v1063 = vpack.c.bf16 %v1028, %v1027
        %v1064 = vpack.c.bf16 %v1030, %v1029
        %v1065 = vpack.c.bf16 %v1032, %v1031
        %v1066 = vpack.c.bf16 %v1034, %v1033
        %v1067 = vld [vmem:[%s5] sm:$0xf]
        %v1068 = vld [vmem:[%s5 + $0x4] sm:$0xf]
        %v1069 = vld [vmem:[%s5 + $0x8] sm:$0xf]
        %v1070 = vld [vmem:[%s5 + $0xc] sm:$0xf]
        %v1071 = vld [vmem:[%s5 + $0x10] sm:$0xf]
        %v1072 = vld [vmem:[%s5 + $0x14] sm:$0xf]
        %v1073 = vld [vmem:[%s5 + $0x18] sm:$0xf]
        %v1074 = vld [vmem:[%s5 + $0x1c] sm:$0xf]
        %v1075 = vld [vmem:[%s5 + $0x20] sm:$0xf]
        %v1076 = vld [vmem:[%s5 + $0x24] sm:$0xf]
        %v1077 = vld [vmem:[%s5 + $0x28] sm:$0xf]
        %v1078 = vld [vmem:[%s5 + $0x2c] sm:$0xf]
        %v1079 = vld [vmem:[%s5 + $0x30] sm:$0xf]
        %v1080 = vld [vmem:[%s5 + $0x34] sm:$0xf]
        %v1081 = vld [vmem:[%s5 + $0x38] sm:$0xf]
        %v1082 = vld [vmem:[%s5 + $0x3c] sm:$0xf]
        %v1083 = vld [vmem:[%s6] sm:$0x1]
        %v1085 = vlaneseq
        %v1086 = vshrl.u32 %v1085, 7
        %v1087 = vsub.s32 0, %v1086
        %v1088 = vrot.slane %v1083, %v1087
        %v1106 = vunpack.c.l.b16 %v1067
        %v1107 = vunpack.c.l.b16 %v1068
        %v1108 = vunpack.c.l.b16 %v1069
        %v1109 = vunpack.c.l.b16 %v1070
        %v1110 = vunpack.c.l.b16 %v1071
        %v1111 = vunpack.c.l.b16 %v1072
        %v1112 = vunpack.c.l.b16 %v1073
        %v1113 = vunpack.c.l.b16 %v1074
        %v1114 = vunpack.c.l.b16 %v1075
        %v1115 = vunpack.c.l.b16 %v1076
        %v1116 = vunpack.c.l.b16 %v1077
        %v1117 = vunpack.c.l.b16 %v1078
        %v1118 = vunpack.c.l.b16 %v1079
        %v1119 = vunpack.c.l.b16 %v1080
        %v1120 = vunpack.c.l.b16 %v1081
        %v1121 = vunpack.c.l.b16 %v1082
        %v1122 = vpack.c.b16 %v1107, %v1106
        %v1123 = vpack.c.b16 %v1109, %v1108
        %v1124 = vpack.c.b16 %v1111, %v1110
        %v1125 = vpack.c.b16 %v1113, %v1112
        %v1126 = vpack.c.b16 %v1115, %v1114
        %v1127 = vpack.c.b16 %v1117, %v1116
        %v1128 = vpack.c.b16 %v1119, %v1118
        %v1129 = vpack.c.b16 %v1121, %v1120
        %1138 = vmatprep.subr.bf16.mxu0 0
        %1139 = vmatpush1.bf16.msra.mxu0 %v1129
        %1140 = vmatprep.subr.bf16.mxu0 0
        %1141 = vmatpush1.bf16.msra.mxu0 %v1128
        %1142 = vmatprep.subr.bf16.mxu0 0
        %1143 = vmatpush1.bf16.msra.mxu0 %v1127
        %1144 = vmatprep.subr.bf16.mxu0 0
        %1145 = vmatpush1.bf16.msra.mxu0 %v1126
        %1146 = vmatprep.subr.bf16.mxu0 0
        %1147 = vmatpush1.bf16.msra.mxu0 %v1125
        %1148 = vmatprep.subr.bf16.mxu0 0
        %1149 = vmatpush1.bf16.msra.mxu0 %v1124
        %1150 = vmatprep.subr.bf16.mxu0 0
        %1151 = vmatpush1.bf16.msra.mxu0 %v1123
        %1152 = vmatprep.subr.bf16.mxu0 0
        %1153 = vmatpush1.bf16.msra.mxu0 %v1122
        %1154 = vmatprep.subr.bf16.mxu0 0
        %1155 = vmatpush2.bf16.msra.mxu0 0
        %1156 = vmatprep.subr.bf16.mxu0 0
        %1157 = vmatpush2.bf16.msra.mxu0 0
        %1158 = vmatprep.subr.bf16.mxu0 0
        %1159 = vmatpush2.bf16.msra.mxu0 0
        %1160 = vmatprep.subr.bf16.mxu0 0
        %1161 = vmatpush2.bf16.msra.mxu0 0
        %1162 = vmatprep.subr.bf16.mxu0 0
        %1163 = vmatpush2.bf16.msra.mxu0 0
        %1164 = vmatprep.subr.bf16.mxu0 0
        %1165 = vmatpush2.bf16.msra.mxu0 0
        %1166 = vmatprep.subr.bf16.mxu0 0
        %1167 = vmatpush2.bf16.msra.mxu0 0
        %1168 = vmatprep.subr.bf16.mxu0 0
        %1169 = vmatpush2.bf16.msra.mxu0 0
        %1170 = vmatprep.mubr.bf16.mxu0 0
        %1171 = vmatmul.mubr.bf16.gmra.mxu0 %v1035
        %v1172 = vpop.f32.mrf.mxu0
        %v1173 = vadd.f32 %v1088, %v1172
        %v1174 = vpop.f32.mrf.mxu0
        %v1175 = vpop.f32.mrf.mxu0
        %v1176 = vadd.f32 %v1088, %v1175
        %v1177 = vpop.f32.mrf.mxu0
        %1178 = vmatprep.mubr.bf16.mxu0 0
        %1179 = vmatmul.mubr.bf16.gmra.mxu0 %v1036
        %v1180 = vpop.f32.mrf.mxu0
        %v1181 = vadd.f32 %v1088, %v1180
        %v1182 = vpop.f32.mrf.mxu0
        %v1183 = vpop.f32.mrf.mxu0
        %v1184 = vadd.f32 %v1088, %v1183
        %v1185 = vpop.f32.mrf.mxu0
        %1186 = vmatprep.mubr.bf16.mxu0 0
        %1187 = vmatmul.mubr.bf16.gmra.mxu0 %v1037
        %v1188 = vpop.f32.mrf.mxu0
        %v1189 = vadd.f32 %v1088, %v1188
        %v1190 = vpop.f32.mrf.mxu0
        %v1191 = vpop.f32.mrf.mxu0
        %v1192 = vadd.f32 %v1088, %v1191
        %v1193 = vpop.f32.mrf.mxu0
        %1194 = vmatprep.mubr.bf16.mxu0 0
        %1195 = vmatmul.mubr.bf16.gmra.mxu0 %v1038
        %v1196 = vpop.f32.mrf.mxu0
        %v1197 = vadd.f32 %v1088, %v1196
        %v1198 = vpop.f32.mrf.mxu0
        %v1199 = vpop.f32.mrf.mxu0
        %v1200 = vadd.f32 %v1088, %v1199
        %v1201 = vpop.f32.mrf.mxu0
        %1202 = vmatprep.mubr.bf16.mxu0 0
        %1203 = vmatmul.mubr.bf16.gmra.mxu0 %v1039
        %v1204 = vpop.f32.mrf.mxu0
        %v1205 = vadd.f32 %v1088, %v1204
        %v1206 = vpop.f32.mrf.mxu0
        %v1207 = vpop.f32.mrf.mxu0
        %v1208 = vadd.f32 %v1088, %v1207
        %v1209 = vpop.f32.mrf.mxu0
        %1210 = vmatprep.mubr.bf16.mxu0 0
        %1211 = vmatmul.mubr.bf16.gmra.mxu0 %v1040
        %v1212 = vpop.f32.mrf.mxu0
        %v1213 = vadd.f32 %v1088, %v1212
        %v1214 = vpop.f32.mrf.mxu0
        %v1215 = vpop.f32.mrf.mxu0
        %v1216 = vadd.f32 %v1088, %v1215
        %v1217 = vpop.f32.mrf.mxu0
        %1218 = vmatprep.mubr.bf16.mxu0 0
        %1219 = vmatmul.mubr.bf16.gmra.mxu0 %v1041
        %v1220 = vpop.f32.mrf.mxu0
        %v1221 = vadd.f32 %v1088, %v1220
        %v1222 = vpop.f32.mrf.mxu0
        %v1223 = vpop.f32.mrf.mxu0
        %v1224 = vadd.f32 %v1088, %v1223
        %v1225 = vpop.f32.mrf.mxu0
        %1226 = vmatprep.mubr.bf16.mxu0 0
        %1227 = vmatmul.mubr.bf16.gmra.mxu0 %v1042
        %v1228 = vpop.f32.mrf.mxu0
        %v1229 = vadd.f32 %v1088, %v1228
        %v1230 = vpop.f32.mrf.mxu0
        %v1231 = vpop.f32.mrf.mxu0
        %v1232 = vadd.f32 %v1088, %v1231
        %v1233 = vpop.f32.mrf.mxu0
        %1234 = vmatprep.mubr.bf16.mxu0 0
        %1235 = vmatmul.mubr.bf16.gmra.mxu0 %v1043
        %v1236 = vpop.f32.mrf.mxu0
        %v1237 = vadd.f32 %v1088, %v1236
        %v1238 = vpop.f32.mrf.mxu0
        %v1239 = vpop.f32.mrf.mxu0
        %v1240 = vadd.f32 %v1088, %v1239
        %v1241 = vpop.f32.mrf.mxu0
        %1242 = vmatprep.mubr.bf16.mxu0 0
        %1243 = vmatmul.mubr.bf16.gmra.mxu0 %v1044
        %v1244 = vpop.f32.mrf.mxu0
        %v1245 = vadd.f32 %v1088, %v1244
        %v1246 = vpop.f32.mrf.mxu0
        %v1247 = vpop.f32.mrf.mxu0
        %v1248 = vadd.f32 %v1088, %v1247
        %v1249 = vpop.f32.mrf.mxu0
        %1250 = vmatprep.mubr.bf16.mxu0 0
        %1251 = vmatmul.mubr.bf16.gmra.mxu0 %v1045
        %v1252 = vpop.f32.mrf.mxu0
        %v1253 = vadd.f32 %v1088, %v1252
        %v1254 = vpop.f32.mrf.mxu0
        %v1255 = vpop.f32.mrf.mxu0
        %v1256 = vadd.f32 %v1088, %v1255
        %v1257 = vpop.f32.mrf.mxu0
        %1258 = vmatprep.mubr.bf16.mxu0 0
        %1259 = vmatmul.mubr.bf16.gmra.mxu0 %v1046
        %v1260 = vpop.f32.mrf.mxu0
        %v1261 = vadd.f32 %v1088, %v1260
        %v1262 = vpop.f32.mrf.mxu0
        %v1263 = vpop.f32.mrf.mxu0
        %v1264 = vadd.f32 %v1088, %v1263
        %v1265 = vpop.f32.mrf.mxu0
        %1266 = vmatprep.mubr.bf16.mxu0 0
        %1267 = vmatmul.mubr.bf16.gmra.mxu0 %v1047
        %v1268 = vpop.f32.mrf.mxu0
        %v1269 = vadd.f32 %v1088, %v1268
        %v1270 = vpop.f32.mrf.mxu0
        %v1271 = vpop.f32.mrf.mxu0
        %v1272 = vadd.f32 %v1088, %v1271
        %v1273 = vpop.f32.mrf.mxu0
        %1274 = vmatprep.mubr.bf16.mxu0 0
        %1275 = vmatmul.mubr.bf16.gmra.mxu0 %v1048
        %v1276 = vpop.f32.mrf.mxu0
        %v1277 = vadd.f32 %v1088, %v1276
        %v1278 = vpop.f32.mrf.mxu0
        %v1279 = vpop.f32.mrf.mxu0
        %v1280 = vadd.f32 %v1088, %v1279
        %v1281 = vpop.f32.mrf.mxu0
        %1282 = vmatprep.mubr.bf16.mxu0 0
        %1283 = vmatmul.mubr.bf16.gmra.mxu0 %v1049
        %v1284 = vpop.f32.mrf.mxu0
        %v1285 = vadd.f32 %v1088, %v1284
        %v1286 = vpop.f32.mrf.mxu0
        %v1287 = vpop.f32.mrf.mxu0
        %v1288 = vadd.f32 %v1088, %v1287
        %v1289 = vpop.f32.mrf.mxu0
        %1290 = vmatprep.mubr.bf16.mxu0 0
        %1291 = vmatmul.mubr.bf16.gmra.mxu0 %v1050
        %v1292 = vpop.f32.mrf.mxu0
        %v1293 = vadd.f32 %v1088, %v1292
        %v1294 = vpop.f32.mrf.mxu0
        %v1295 = vpop.f32.mrf.mxu0
        %v1296 = vadd.f32 %v1088, %v1295
        %v1297 = vpop.f32.mrf.mxu0
        %1298 = vmatprep.mubr.bf16.mxu0 0
        %1299 = vmatmul.mubr.bf16.gmra.mxu0 %v1051
        %v1300 = vpop.f32.mrf.mxu0
        %v1301 = vadd.f32 %v1088, %v1300
        %v1302 = vpop.f32.mrf.mxu0
        %v1303 = vpop.f32.mrf.mxu0
        %v1304 = vadd.f32 %v1088, %v1303
        %v1305 = vpop.f32.mrf.mxu0
        %1306 = vmatprep.mubr.bf16.mxu0 0
        %1307 = vmatmul.mubr.bf16.gmra.mxu0 %v1052
        %v1308 = vpop.f32.mrf.mxu0
        %v1309 = vadd.f32 %v1088, %v1308
        %v1310 = vpop.f32.mrf.mxu0
        %v1311 = vpop.f32.mrf.mxu0
        %v1312 = vadd.f32 %v1088, %v1311
        %v1313 = vpop.f32.mrf.mxu0
        %1314 = vmatprep.mubr.bf16.mxu0 0
        %1315 = vmatmul.mubr.bf16.gmra.mxu0 %v1053
        %v1316 = vpop.f32.mrf.mxu0
        %v1317 = vadd.f32 %v1088, %v1316
        %v1318 = vpop.f32.mrf.mxu0
        %v1319 = vpop.f32.mrf.mxu0
        %v1320 = vadd.f32 %v1088, %v1319
        %v1321 = vpop.f32.mrf.mxu0
        %1322 = vmatprep.mubr.bf16.mxu0 0
        %1323 = vmatmul.mubr.bf16.gmra.mxu0 %v1054
        %v1324 = vpop.f32.mrf.mxu0
        %v1325 = vadd.f32 %v1088, %v1324
        %v1326 = vpop.f32.mrf.mxu0
        %v1327 = vpop.f32.mrf.mxu0
        %v1328 = vadd.f32 %v1088, %v1327
        %v1329 = vpop.f32.mrf.mxu0
        %1330 = vmatprep.mubr.bf16.mxu0 0
        %1331 = vmatmul.mubr.bf16.gmra.mxu0 %v1055
        %v1332 = vpop.f32.mrf.mxu0
        %v1333 = vadd.f32 %v1088, %v1332
        %v1334 = vpop.f32.mrf.mxu0
        %v1335 = vpop.f32.mrf.mxu0
        %v1336 = vadd.f32 %v1088, %v1335
        %v1337 = vpop.f32.mrf.mxu0
        %1338 = vmatprep.mubr.bf16.mxu0 0
        %1339 = vmatmul.mubr.bf16.gmra.mxu0 %v1056
        %v1340 = vpop.f32.mrf.mxu0
        %v1341 = vadd.f32 %v1088, %v1340
        %v1342 = vpop.f32.mrf.mxu0
        %v1343 = vpop.f32.mrf.mxu0
        %v1344 = vadd.f32 %v1088, %v1343
        %v1345 = vpop.f32.mrf.mxu0
        %1346 = vmatprep.mubr.bf16.mxu0 0
        %1347 = vmatmul.mubr.bf16.gmra.mxu0 %v1057
        %v1348 = vpop.f32.mrf.mxu0
        %v1349 = vadd.f32 %v1088, %v1348
        %v1350 = vpop.f32.mrf.mxu0
        %v1351 = vpop.f32.mrf.mxu0
        %v1352 = vadd.f32 %v1088, %v1351
        %v1353 = vpop.f32.mrf.mxu0
        %1354 = vmatprep.mubr.bf16.mxu0 0
        %1355 = vmatmul.mubr.bf16.gmra.mxu0 %v1058
        %v1356 = vpop.f32.mrf.mxu0
        %v1357 = vadd.f32 %v1088, %v1356
        %v1358 = vpop.f32.mrf.mxu0
        %v1359 = vpop.f32.mrf.mxu0
        %v1360 = vadd.f32 %v1088, %v1359
        %v1361 = vpop.f32.mrf.mxu0
        %1362 = vmatprep.mubr.bf16.mxu0 0
        %1363 = vmatmul.mubr.bf16.gmra.mxu0 %v1059
        %v1364 = vpop.f32.mrf.mxu0
        %v1365 = vadd.f32 %v1088, %v1364
        %v1366 = vpop.f32.mrf.mxu0
        %v1367 = vpop.f32.mrf.mxu0
        %v1368 = vadd.f32 %v1088, %v1367
        %v1369 = vpop.f32.mrf.mxu0
        %1370 = vmatprep.mubr.bf16.mxu0 0
        %1371 = vmatmul.mubr.bf16.gmra.mxu0 %v1060
        %v1372 = vpop.f32.mrf.mxu0
        %v1373 = vadd.f32 %v1088, %v1372
        %v1374 = vpop.f32.mrf.mxu0
        %v1375 = vpop.f32.mrf.mxu0
        %v1376 = vadd.f32 %v1088, %v1375
        %v1377 = vpop.f32.mrf.mxu0
        %1378 = vmatprep.mubr.bf16.mxu0 0
        %1379 = vmatmul.mubr.bf16.gmra.mxu0 %v1061
        %v1380 = vpop.f32.mrf.mxu0
        %v1381 = vadd.f32 %v1088, %v1380
        %v1382 = vpop.f32.mrf.mxu0
        %v1383 = vpop.f32.mrf.mxu0
        %v1384 = vadd.f32 %v1088, %v1383
        %v1385 = vpop.f32.mrf.mxu0
        %1386 = vmatprep.mubr.bf16.mxu0 0
        %1387 = vmatmul.mubr.bf16.gmra.mxu0 %v1062
        %v1388 = vpop.f32.mrf.mxu0
        %v1389 = vadd.f32 %v1088, %v1388
        %v1390 = vpop.f32.mrf.mxu0
        %v1391 = vpop.f32.mrf.mxu0
        %v1392 = vadd.f32 %v1088, %v1391
        %v1393 = vpop.f32.mrf.mxu0
        %1394 = vmatprep.mubr.bf16.mxu0 0
        %1395 = vmatmul.mubr.bf16.gmra.mxu0 %v1063
        %v1396 = vpop.f32.mrf.mxu0
        %v1397 = vadd.f32 %v1088, %v1396
        %v1398 = vpop.f32.mrf.mxu0
        %v1399 = vpop.f32.mrf.mxu0
        %v1400 = vadd.f32 %v1088, %v1399
        %v1401 = vpop.f32.mrf.mxu0
        %1402 = vmatprep.mubr.bf16.mxu0 0
        %1403 = vmatmul.mubr.bf16.gmra.mxu0 %v1064
        %v1404 = vpop.f32.mrf.mxu0
        %v1405 = vadd.f32 %v1088, %v1404
        %v1406 = vpop.f32.mrf.mxu0
        %v1407 = vpop.f32.mrf.mxu0
        %v1408 = vadd.f32 %v1088, %v1407
        %v1409 = vpop.f32.mrf.mxu0
        %1410 = vmatprep.mubr.bf16.mxu0 0
        %1411 = vmatmul.mubr.bf16.gmra.mxu0 %v1065
        %v1412 = vpop.f32.mrf.mxu0
        %v1413 = vadd.f32 %v1088, %v1412
        %v1414 = vpop.f32.mrf.mxu0
        %v1415 = vpop.f32.mrf.mxu0
        %v1416 = vadd.f32 %v1088, %v1415
        %v1417 = vpop.f32.mrf.mxu0
        %1418 = vmatprep.mubr.bf16.mxu0 0
        %1419 = vmatmul.mubr.bf16.gmra.mxu0 %v1066
        %v1420 = vpop.f32.mrf.mxu0
        %v1421 = vadd.f32 %v1088, %v1420
        %v1422 = vpop.f32.mrf.mxu0
        %v1423 = vpop.f32.mrf.mxu0
        %v1424 = vadd.f32 %v1088, %v1423
        %v1425 = vpop.f32.mrf.mxu0
        %1426 = vdwg.mxu0
        %v1427 = vpack.c.bf16 %v1176, %v1173
        %v1428 = vpack.c.bf16 %v1184, %v1181
        %v1429 = vpack.c.bf16 %v1192, %v1189
        %v1430 = vpack.c.bf16 %v1200, %v1197
        %v1431 = vpack.c.bf16 %v1208, %v1205
        %v1432 = vpack.c.bf16 %v1216, %v1213
        %v1433 = vpack.c.bf16 %v1224, %v1221
        %v1434 = vpack.c.bf16 %v1232, %v1229
        %v1435 = vpack.c.bf16 %v1240, %v1237
        %v1436 = vpack.c.bf16 %v1248, %v1245
        %v1437 = vpack.c.bf16 %v1256, %v1253
        %v1438 = vpack.c.bf16 %v1264, %v1261
        %v1439 = vpack.c.bf16 %v1272, %v1269
        %v1440 = vpack.c.bf16 %v1280, %v1277
        %v1441 = vpack.c.bf16 %v1288, %v1285
        %v1442 = vpack.c.bf16 %v1296, %v1293
        %v1443 = vpack.c.bf16 %v1304, %v1301
        %v1444 = vpack.c.bf16 %v1312, %v1309
        %v1445 = vpack.c.bf16 %v1320, %v1317
        %v1446 = vpack.c.bf16 %v1328, %v1325
        %v1447 = vpack.c.bf16 %v1336, %v1333
        %v1448 = vpack.c.bf16 %v1344, %v1341
        %v1449 = vpack.c.bf16 %v1352, %v1349
        %v1450 = vpack.c.bf16 %v1360, %v1357
        %v1451 = vpack.c.bf16 %v1368, %v1365
        %v1452 = vpack.c.bf16 %v1376, %v1373
        %v1453 = vpack.c.bf16 %v1384, %v1381
        %v1454 = vpack.c.bf16 %v1392, %v1389
        %v1455 = vpack.c.bf16 %v1400, %v1397
        %v1456 = vpack.c.bf16 %v1408, %v1405
        %v1457 = vpack.c.bf16 %v1416, %v1413
        %v1458 = vpack.c.bf16 %v1424, %v1421
        %v1491 = vunpack.c.l.b16 %v1427
        %v1492 = vunpack.c.h.b16 %v1427
        %v1493 = vunpack.c.l.b16 %v1428
        %v1494 = vunpack.c.h.b16 %v1428
        %v1495 = vunpack.c.l.b16 %v1429
        %v1496 = vunpack.c.h.b16 %v1429
        %v1497 = vunpack.c.l.b16 %v1430
        %v1498 = vunpack.c.h.b16 %v1430
        %v1499 = vunpack.c.l.b16 %v1431
        %v1500 = vunpack.c.h.b16 %v1431
        %v1501 = vunpack.c.l.b16 %v1432
        %v1502 = vunpack.c.h.b16 %v1432
        %v1503 = vunpack.c.l.b16 %v1433
        %v1504 = vunpack.c.h.b16 %v1433
        %v1505 = vunpack.c.l.b16 %v1434
        %v1506 = vunpack.c.h.b16 %v1434
        %v1507 = vunpack.c.l.b16 %v1435
        %v1508 = vunpack.c.h.b16 %v1435
        %v1509 = vunpack.c.l.b16 %v1436
        %v1510 = vunpack.c.h.b16 %v1436
        %v1511 = vunpack.c.l.b16 %v1437
        %v1512 = vunpack.c.h.b16 %v1437
        %v1513 = vunpack.c.l.b16 %v1438
        %v1514 = vunpack.c.h.b16 %v1438
        %v1515 = vunpack.c.l.b16 %v1439
        %v1516 = vunpack.c.h.b16 %v1439
        %v1517 = vunpack.c.l.b16 %v1440
        %v1518 = vunpack.c.h.b16 %v1440
        %v1519 = vunpack.c.l.b16 %v1441
        %v1520 = vunpack.c.h.b16 %v1441
        %v1521 = vunpack.c.l.b16 %v1442
        %v1522 = vunpack.c.h.b16 %v1442
        %v1523 = vunpack.c.l.b16 %v1443
        %v1524 = vunpack.c.h.b16 %v1443
        %v1525 = vunpack.c.l.b16 %v1444
        %v1526 = vunpack.c.h.b16 %v1444
        %v1527 = vunpack.c.l.b16 %v1445
        %v1528 = vunpack.c.h.b16 %v1445
        %v1529 = vunpack.c.l.b16 %v1446
        %v1530 = vunpack.c.h.b16 %v1446
        %v1531 = vunpack.c.l.b16 %v1447
        %v1532 = vunpack.c.h.b16 %v1447
        %v1533 = vunpack.c.l.b16 %v1448
        %v1534 = vunpack.c.h.b16 %v1448
        %v1535 = vunpack.c.l.b16 %v1449
        %v1536 = vunpack.c.h.b16 %v1449
        %v1537 = vunpack.c.l.b16 %v1450
        %v1538 = vunpack.c.h.b16 %v1450
        %v1539 = vunpack.c.l.b16 %v1451
        %v1540 = vunpack.c.h.b16 %v1451
        %v1541 = vunpack.c.l.b16 %v1452
        %v1542 = vunpack.c.h.b16 %v1452
        %v1543 = vunpack.c.l.b16 %v1453
        %v1544 = vunpack.c.h.b16 %v1453
        %v1545 = vunpack.c.l.b16 %v1454
        %v1546 = vunpack.c.h.b16 %v1454
        %v1547 = vunpack.c.l.b16 %v1455
        %v1548 = vunpack.c.h.b16 %v1455
        %v1549 = vunpack.c.l.b16 %v1456
        %v1550 = vunpack.c.h.b16 %v1456
        %v1551 = vunpack.c.l.b16 %v1457
        %v1552 = vunpack.c.h.b16 %v1457
        %v1553 = vunpack.c.l.b16 %v1458
        %v1554 = vunpack.c.h.b16 %v1458
        %v1555 = vpack.c.b16 %v1491, %v1491
        %v1556 = vpack.c.b16 %v1492, %v1492
        %v1557 = vpack.c.b16 %v1493, %v1493
        %v1558 = vpack.c.b16 %v1494, %v1494
        %v1559 = vpack.c.b16 %v1495, %v1495
        %v1560 = vpack.c.b16 %v1496, %v1496
        %v1561 = vpack.c.b16 %v1497, %v1497
        %v1562 = vpack.c.b16 %v1498, %v1498
        %v1563 = vpack.c.b16 %v1499, %v1499
        %v1564 = vpack.c.b16 %v1500, %v1500
        %v1565 = vpack.c.b16 %v1501, %v1501
        %v1566 = vpack.c.b16 %v1502, %v1502
        %v1567 = vpack.c.b16 %v1503, %v1503
        %v1568 = vpack.c.b16 %v1504, %v1504
        %v1569 = vpack.c.b16 %v1505, %v1505
        %v1570 = vpack.c.b16 %v1506, %v1506
        %v1571 = vpack.c.b16 %v1507, %v1507
        %v1572 = vpack.c.b16 %v1508, %v1508
        %v1573 = vpack.c.b16 %v1509, %v1509
        %v1574 = vpack.c.b16 %v1510, %v1510
        %v1575 = vpack.c.b16 %v1511, %v1511
        %v1576 = vpack.c.b16 %v1512, %v1512
        %v1577 = vpack.c.b16 %v1513, %v1513
        %v1578 = vpack.c.b16 %v1514, %v1514
        %v1579 = vpack.c.b16 %v1515, %v1515
        %v1580 = vpack.c.b16 %v1516, %v1516
        %v1581 = vpack.c.b16 %v1517, %v1517
        %v1582 = vpack.c.b16 %v1518, %v1518
        %v1583 = vpack.c.b16 %v1519, %v1519
        %v1584 = vpack.c.b16 %v1520, %v1520
        %v1585 = vpack.c.b16 %v1521, %v1521
        %v1586 = vpack.c.b16 %v1522, %v1522
        %v1587 = vpack.c.b16 %v1523, %v1523
        %v1588 = vpack.c.b16 %v1524, %v1524
        %v1589 = vpack.c.b16 %v1525, %v1525
        %v1590 = vpack.c.b16 %v1526, %v1526
        %v1591 = vpack.c.b16 %v1527, %v1527
        %v1592 = vpack.c.b16 %v1528, %v1528
        %v1593 = vpack.c.b16 %v1529, %v1529
        %v1594 = vpack.c.b16 %v1530, %v1530
        %v1595 = vpack.c.b16 %v1531, %v1531
        %v1596 = vpack.c.b16 %v1532, %v1532
        %v1597 = vpack.c.b16 %v1533, %v1533
        %v1598 = vpack.c.b16 %v1534, %v1534
        %v1599 = vpack.c.b16 %v1535, %v1535
        %v1600 = vpack.c.b16 %v1536, %v1536
        %v1601 = vpack.c.b16 %v1537, %v1537
        %v1602 = vpack.c.b16 %v1538, %v1538
        %v1603 = vpack.c.b16 %v1539, %v1539
        %v1604 = vpack.c.b16 %v1540, %v1540
        %v1605 = vpack.c.b16 %v1541, %v1541
        %v1606 = vpack.c.b16 %v1542, %v1542
        %v1607 = vpack.c.b16 %v1543, %v1543
        %v1608 = vpack.c.b16 %v1544, %v1544
        %v1609 = vpack.c.b16 %v1545, %v1545
        %v1610 = vpack.c.b16 %v1546, %v1546
        %v1611 = vpack.c.b16 %v1547, %v1547
        %v1612 = vpack.c.b16 %v1548, %v1548
        %v1613 = vpack.c.b16 %v1549, %v1549
        %v1614 = vpack.c.b16 %v1550, %v1550
        %v1615 = vpack.c.b16 %v1551, %v1551
        %v1616 = vpack.c.b16 %v1552, %v1552
        %v1617 = vpack.c.b16 %v1553, %v1553
        %v1618 = vpack.c.b16 %v1554, %v1554
        %vm1683 = vcmask 257024
        %1684 = vst.msk [vmem:[%s330] sm:$0xf] %vm1683, %v1555
        %1685 = vst.msk [vmem:[%s330 + $0x4] sm:$0xf] %vm1683, %v1556
        %1686 = vst.msk [vmem:[%s330 + $0x8] sm:$0xf] %vm1683, %v1557
        %1687 = vst.msk [vmem:[%s330 + $0xc] sm:$0xf] %vm1683, %v1558
        %1688 = vst.msk [vmem:[%s330 + $0x10] sm:$0xf] %vm1683, %v1559
        %1689 = vst.msk [vmem:[%s330 + $0x14] sm:$0xf] %vm1683, %v1560
        %1690 = vst.msk [vmem:[%s330 + $0x18] sm:$0xf] %vm1683, %v1561
        %1691 = vst.msk [vmem:[%s330 + $0x1c] sm:$0xf] %vm1683, %v1562
        %1692 = vst.msk [vmem:[%s330 + $0x20] sm:$0xf] %vm1683, %v1563
        %1693 = vst.msk [vmem:[%s330 + $0x24] sm:$0xf] %vm1683, %v1564
        %1694 = vst.msk [vmem:[%s330 + $0x28] sm:$0xf] %vm1683, %v1565
        %1695 = vst.msk [vmem:[%s330 + $0x2c] sm:$0xf] %vm1683, %v1566
        %1696 = vst.msk [vmem:[%s330 + $0x30] sm:$0xf] %vm1683, %v1567
        %1697 = vst.msk [vmem:[%s330 + $0x34] sm:$0xf] %vm1683, %v1568
        %1698 = vst.msk [vmem:[%s330 + $0x38] sm:$0xf] %vm1683, %v1569
        %1699 = vst.msk [vmem:[%s330 + $0x3c] sm:$0xf] %vm1683, %v1570
        %1700 = vst.msk [vmem:[%s330 + $0x40] sm:$0xf] %vm1683, %v1571
        %1701 = vst.msk [vmem:[%s330 + $0x44] sm:$0xf] %vm1683, %v1572
        %1702 = vst.msk [vmem:[%s330 + $0x48] sm:$0xf] %vm1683, %v1573
        %1703 = vst.msk [vmem:[%s330 + $0x4c] sm:$0xf] %vm1683, %v1574
        %1704 = vst.msk [vmem:[%s330 + $0x50] sm:$0xf] %vm1683, %v1575
        %1705 = vst.msk [vmem:[%s330 + $0x54] sm:$0xf] %vm1683, %v1576
        %1706 = vst.msk [vmem:[%s330 + $0x58] sm:$0xf] %vm1683, %v1577
        %1707 = vst.msk [vmem:[%s330 + $0x5c] sm:$0xf] %vm1683, %v1578
        %1708 = vst.msk [vmem:[%s330 + $0x60] sm:$0xf] %vm1683, %v1579
        %1709 = vst.msk [vmem:[%s330 + $0x64] sm:$0xf] %vm1683, %v1580
        %1710 = vst.msk [vmem:[%s330 + $0x68] sm:$0xf] %vm1683, %v1581
        %1711 = vst.msk [vmem:[%s330 + $0x6c] sm:$0xf] %vm1683, %v1582
        %1712 = vst.msk [vmem:[%s330 + $0x70] sm:$0xf] %vm1683, %v1583
        %1713 = vst.msk [vmem:[%s330 + $0x74] sm:$0xf] %vm1683, %v1584
        %1714 = vst.msk [vmem:[%s330 + $0x78] sm:$0xf] %vm1683, %v1585
        %1715 = vst.msk [vmem:[%s330 + $0x7c] sm:$0xf] %vm1683, %v1586
        %1716 = vst.msk [vmem:[%s330 + $0x80] sm:$0xf] %vm1683, %v1587
        %1717 = vst.msk [vmem:[%s330 + $0x84] sm:$0xf] %vm1683, %v1588
        %1718 = vst.msk [vmem:[%s330 + $0x88] sm:$0xf] %vm1683, %v1589
        %1719 = vst.msk [vmem:[%s330 + $0x8c] sm:$0xf] %vm1683, %v1590
        %1720 = vst.msk [vmem:[%s330 + $0x90] sm:$0xf] %vm1683, %v1591
        %1721 = vst.msk [vmem:[%s330 + $0x94] sm:$0xf] %vm1683, %v1592
        %1722 = vst.msk [vmem:[%s330 + $0x98] sm:$0xf] %vm1683, %v1593
        %1723 = vst.msk [vmem:[%s330 + $0x9c] sm:$0xf] %vm1683, %v1594
        %1724 = vst.msk [vmem:[%s330 + $0xa0] sm:$0xf] %vm1683, %v1595
        %1725 = vst.msk [vmem:[%s330 + $0xa4] sm:$0xf] %vm1683, %v1596
        %1726 = vst.msk [vmem:[%s330 + $0xa8] sm:$0xf] %vm1683, %v1597
        %1727 = vst.msk [vmem:[%s330 + $0xac] sm:$0xf] %vm1683, %v1598
        %1728 = vst.msk [vmem:[%s330 + $0xb0] sm:$0xf] %vm1683, %v1599
        %1729 = vst.msk [vmem:[%s330 + $0xb4] sm:$0xf] %vm1683, %v1600
        %1730 = vst.msk [vmem:[%s330 + $0xb8] sm:$0xf] %vm1683, %v1601
        %1731 = vst.msk [vmem:[%s330 + $0xbc] sm:$0xf] %vm1683, %v1602
        %1732 = vst.msk [vmem:[%s330 + $0xc0] sm:$0xf] %vm1683, %v1603
        %1733 = vst.msk [vmem:[%s330 + $0xc4] sm:$0xf] %vm1683, %v1604
        %1734 = vst.msk [vmem:[%s330 + $0xc8] sm:$0xf] %vm1683, %v1605
        %1735 = vst.msk [vmem:[%s330 + $0xcc] sm:$0xf] %vm1683, %v1606
        %1736 = vst.msk [vmem:[%s330 + $0xd0] sm:$0xf] %vm1683, %v1607
        %1737 = vst.msk [vmem:[%s330 + $0xd4] sm:$0xf] %vm1683, %v1608
        %1738 = vst.msk [vmem:[%s330 + $0xd8] sm:$0xf] %vm1683, %v1609
        %1739 = vst.msk [vmem:[%s330 + $0xdc] sm:$0xf] %vm1683, %v1610
        %1740 = vst.msk [vmem:[%s330 + $0xe0] sm:$0xf] %vm1683, %v1611
        %1741 = vst.msk [vmem:[%s330 + $0xe4] sm:$0xf] %vm1683, %v1612
        %1742 = vst.msk [vmem:[%s330 + $0xe8] sm:$0xf] %vm1683, %v1613
        %1743 = vst.msk [vmem:[%s330 + $0xec] sm:$0xf] %vm1683, %v1614
        %1744 = vst.msk [vmem:[%s330 + $0xf0] sm:$0xf] %vm1683, %v1615
        %1745 = vst.msk [vmem:[%s330 + $0xf4] sm:$0xf] %vm1683, %v1616
        %1746 = vst.msk [vmem:[%s330 + $0xf8] sm:$0xf] %vm1683, %v1617
        %1747 = vst.msk [vmem:[%s330 + $0xfc] sm:$0xf] %vm1683, %v1618
        %s1748 = smul.u32 64, %s24
        %p1749 = scmp.lt.s32.totalorder %s23, 3
        %s1750 = scalar_select %p1749, %s23, 3
        %p1751 = scmp.lt.s32.totalorder %s1748, 63
        %s1752 = scalar_select %p1751, %s1748, 63
        %s1753 = smul.addr %s1750, 64
        %s1754 = sadd.s32 %s1752, %s1753
        %s1755 = smul.addr %s1754, 4
        %s1756 = scalar_lea.vmem %s7, %s1755
        // Predicated region
        $region53: #{tpu_custom_call.1} parent=47 // pred_check
          %p1757 = pneg %p205
        $region54: #{tpu_custom_call.1} parent=47 // pred_check_branch
          %1759 = sbr.rel (%p1757) target = $region56
        $region55: #{tpu_custom_call.1} parent=47 // pred_region
          %s1760 = smul.u32 64, %s24
        $region56: #{tpu_custom_call.1} parent=47 // pred_fallthru
          _
      $region48: #{tpu_custom_call.1} parent=5 // pred_fallthru
        _
      %p1761 = scmp.le.s32.totalorder 2, %s14
      // Predicated region
      $region57: #{tpu_custom_call.1} parent=5 // pred_check
        %p1762 = pneg %p1761
      $region58: #{tpu_custom_call.1} parent=5 // pred_check_branch
        %1764 = sbr.rel (%p1762) target = $region60
      $region59: #{tpu_custom_call.1} parent=5 // pred_region
        %s1765 = ssub.s32 %s14, 2
        // Predicated region
        $region61: #{tpu_custom_call.1} parent=59 // pred_check
          %p1766 = pneg %p211
        $region62: #{tpu_custom_call.1} parent=59 // pred_check_branch
          %1768 = sbr.rel (%p1766) target = $region64
        $region63: #{tpu_custom_call.1} parent=59 // pred_region
          %s1769 = smul.u32 64, %s26
          %p1770 = scmp.lt.s32.totalorder %s25, 3
          %s1771 = scalar_select %p1770, %s25, 3
          %p1772 = scmp.lt.s32.totalorder %s1769, 63
          %s1773 = scalar_select %p1772, %s1769, 63
          %s1774 = smul.addr %s1771, 64
          %s1775 = sadd.s32 %s1773, %s1774
          %s1776 = smul.addr %s1775, 4
          %s1777 = scalar_lea.vmem %s7, %s1776
        $region64: #{tpu_custom_call.1} parent=59 // pred_fallthru
          _
      $region60: #{tpu_custom_call.1} parent=5 // pred_fallthru
        _
    $region6: #{tpu_custom_call.1} parent=1 // loop_footer
      %s18 = sadd.s32 1, %s14
    $region7: #{tpu_custom_call.1} parent=1 // loop_footer_branch
      %13 = sbr.rel target = $region3
    $region8: #{tpu_custom_call.1} parent=1 // loop_exit
      _
    %1778 = vsyncpa [#allocation3], 1
    %s1779 = scalar_lea.sflag [#allocation3], 1
    %1780 = vsyncpa %s1779, 1

</llo_original>
